<compile_context>
chip_gen: v5e
topology: v5e:2x2
jax: 0.10.0
libtpu: 0.0.40
codegen_flags: <defaults>
</compile_context>

<pallas_src>
import jax
import jax.numpy as jnp
from jax.experimental import pallas as pl
from jax.experimental.pallas import tpu as pltpu


def fused_conv_kernel(xph_ref, w1_ref, b1_ref, w2_ref, b2_ref, out_ref, mid_ref):
    """Fused conv1 -> shift/relu -> conv2 -> shift/relu.

    xph_ref : (2, 12, 9, 9) VMEM  phase-split padded input:
              xph[n, c*4 + pi*2 + pj, r, s] == xpad[n, c, 2r+pi, 2s+pj]
    w1_ref  : (108,) SMEM  conv1 weights, flat (k, c, i, j) order
    b1_ref  : (4,)   SMEM  conv1 bias with the "-1" shift folded in
    w2_ref  : (4, 8, 5, 5) VMEM  conv2 weights
    b2_ref  : (1, 4) VMEM  conv2 bias with the "-0.5" shift folded in
    out_ref : (4, 4) VMEM  rows = conv2 output position (oh*2+ow), cols = C_out
    mid_ref : (8, 10, 10) VMEM scratch = zero-padded conv2 input (stays in VMEM)
    """
    # ---------------- conv1: direct accumulation over the 3x3 taps -----------
    mid_ref[...] = jnp.zeros_like(mid_ref)
    acc = [jnp.zeros((2, 8, 8), jnp.float32) for _ in range(4)]
    for c in range(3):
        for i in range(3):
            for j in range(3):
                # (2, 8, 8) window: xpad[n, c, 2*oh+i, 2*ow+j] for oh, ow in [0, 8)
                win = xph_ref[:, c * 4 + (i % 2) * 2 + (j % 2),
                              i // 2:i // 2 + 8, j // 2:j // 2 + 8]
                for k in range(4):
                    acc[k] = acc[k] + w1_ref[((k * 3 + c) * 3 + i) * 3 + j] * win

    # bias (with folded -1) + ReLU, then scatter into the padded conv2-input
    # scratch, folding (batch=2, C=4) -> 8 channels (the unsqueeze reinterp).
    for k in range(4):
        v = jnp.maximum(acc[k] + b1_ref[k], 0.0)          # (2, 8, 8)
        for n in range(2):
            mid_ref[n * 4 + k, 1:9, 1:9] = v[n]

    # ---------------- conv2: 2x2 output positions, VPU contraction -----------
    w2v = w2_ref[...]                                     # (4, 8, 5, 5)
    w2c = [w2v[:, c2] for c2 in range(8)]                 # each (4, 5, 5)
    b2e = b2_ref[0, :]                                    # (4,)
    for oh in range(2):
        for ow in range(2):
            patch = mid_ref[:, oh * 4:oh * 4 + 5, ow * 4:ow * 4 + 5]   # (8,5,5)
            tot = jnp.zeros((4, 5, 5), jnp.float32)
            for c2 in range(8):
                tot = tot + w2c[c2] * patch[c2]           # (4, 5, 5)
            red = tot.sum(axis=-1).sum(axis=-1)           # (4,)
            out_ref[oh * 2 + ow, :] = jnp.maximum(red + b2e, 0.0)


def _model_forward(x, params):
    w1, b1, w2, b2 = params
    n, cin, _, _ = x.shape                                # (2, 3, 16, 16)

    # Host-side prep (fused by jit): pad, phase-split for the stride-2 conv,
    # flatten conv1 weights for SMEM, fold the constant shifts into the biases.
    xp = jnp.pad(x, ((0, 0), (0, 0), (1, 1), (1, 1)))                   # (2,3,18,18)
    xph = xp.reshape(n, cin, 9, 2, 9, 2).transpose(0, 1, 3, 5, 2, 4)    # (n,c,pi,pj,9,9)
    xph = xph.reshape(n, cin * 4, 9, 9)                                 # (2,12,9,9)
    w1f = w1.reshape(-1).astype(jnp.float32)                            # (108,)
    b1e = (b1 - 1.0).astype(jnp.float32)                                # (4,)
    b2e = (b2 - 0.5).reshape(1, 4).astype(jnp.float32)                  # (1,4)

    out2d = pl.pallas_call(
        fused_conv_kernel,
        out_shape=jax.ShapeDtypeStruct((4, 4), jnp.float32),
        in_specs=[
            pl.BlockSpec(memory_space=pltpu.MemorySpace.VMEM),   # xph
            pl.BlockSpec(memory_space=pltpu.MemorySpace.SMEM),   # w1 (scalars)
            pl.BlockSpec(memory_space=pltpu.MemorySpace.SMEM),   # b1 - 1
            pl.BlockSpec(memory_space=pltpu.MemorySpace.VMEM),   # w2
            pl.BlockSpec(memory_space=pltpu.MemorySpace.VMEM),   # b2 - 0.5
        ],
        out_specs=pl.BlockSpec(memory_space=pltpu.MemorySpace.VMEM),
        scratch_shapes=[pltpu.VMEM((8, 10, 10), jnp.float32)],   # padded conv2 input
    )(xph, w1f, b1e, w2.astype(jnp.float32), b2e)

    # rows = (oh*2 + ow), cols = cout  ->  (1, 4, 2, 2)
    return out2d.reshape(2, 2, 4).transpose(2, 0, 1)[None]


model_forward = jax.jit(_model_forward)


if __name__ == "__main__":
    key = jax.random.PRNGKey(0)
    k1, k2, k3, k4, k5 = jax.random.split(key, 5)
    # Inputs / deterministic parameter init (shapes from the module's __init__).
    x = jax.random.normal(k1, (2, 3, 16, 16), jnp.float32)
    w1 = jax.random.normal(k2, (4, 3, 3, 3), jnp.float32) * 0.1
    b1 = jax.random.normal(k3, (4,), jnp.float32) * 0.1
    w2 = jax.random.normal(k4, (4, 8, 5, 5), jnp.float32) * 0.1
    b2 = jax.random.normal(k5, (4,), jnp.float32) * 0.1
    params = (w1, b1, w2, b2)

    out = model_forward(x, params)
    out = jax.block_until_ready(out)

    # Pure-JAX reference check (lax conv, highest precision).
    def ref_conv(xx, ww, bb, stride, pad):
        y = jax.lax.conv_general_dilated(
            xx, ww, window_strides=(stride, stride),
            padding=((pad, pad), (pad, pad)),
            dimension_numbers=("NCHW", "OIHW", "NCHW"),
            precision=jax.lax.Precision.HIGHEST)
        return y + bb.reshape(1, -1, 1, 1)

    r1 = jnp.maximum(ref_conv(x, w1, b1, 2, 1) - 1.0, 0.0)
    r2 = jnp.maximum(ref_conv(r1.reshape(1, 8, 8, 8), w2, b2, 4, 1) - 0.5, 0.0)

    assert out.shape == (1, 4, 2, 2), out.shape
    assert jnp.allclose(out, r2, atol=1e-4, rtol=1e-4)
    print("KERNEL_OK")
</pallas_src>

<mosaic_0001>
module attributes {stable_mosaic.version = 11 : i64} {
  func.func @fused_conv_kernel(%arg0: memref<2x12x9x9xf32, #tpu.memory_space<vmem>>, %arg1: memref<108xf32, #tpu.memory_space<smem>>, %arg2: memref<4xf32, #tpu.memory_space<smem>>, %arg3: memref<4x8x5x5xf32, #tpu.memory_space<vmem>>, %arg4: memref<1x4xf32, #tpu.memory_space<vmem>>, %arg5: memref<4x4xf32, #tpu.memory_space<vmem>>, %arg6: memref<8x10x10xf32, #tpu.memory_space<vmem>>) attributes {dimension_semantics = [], scalar_prefetch = 0 : i64, scratch_operands = 1 : i64, tpu.core_type = #tpu.core_type<tc>} {
    %cst = arith.constant 0.000000e+00 : f32
    %0 = vector.broadcast %cst : f32 to vector<8x10x10xf32>
    %c0 = arith.constant 0 : index
    %c0_0 = arith.constant 0 : index
    %c0_1 = arith.constant 0 : index
    %1 = vector.load %arg6[%c0, %c0_0, %c0_1] : memref<8x10x10xf32, #tpu.memory_space<vmem>>, vector<8x10x10xf32>
    tpu.vector_store %arg6[%c0, %c0_0, %c0_1], %0 {strides = array<i32>} : memref<8x10x10xf32, #tpu.memory_space<vmem>>, vector<8x10x10xf32>,
    %cst_2 = arith.constant 0.000000e+00 : f32
    %2 = vector.broadcast %cst_2 : f32 to vector<2x8x8xf32>
    %cst_3 = arith.constant 0.000000e+00 : f32
    %3 = vector.broadcast %cst_3 : f32 to vector<2x8x8xf32>
    %cst_4 = arith.constant 0.000000e+00 : f32
    %4 = vector.broadcast %cst_4 : f32 to vector<2x8x8xf32>
    %cst_5 = arith.constant 0.000000e+00 : f32
    %5 = vector.broadcast %cst_5 : f32 to vector<2x8x8xf32>
    %c0_6 = arith.constant 0 : index
    %c0_7 = arith.constant 0 : index
    %c0_8 = arith.constant 0 : index
    %c0_9 = arith.constant 0 : index
    %6 = vector.load %arg0[%c0_6, %c0_7, %c0_8, %c0_9] : memref<2x12x9x9xf32, #tpu.memory_space<vmem>>, vector<2x1x8x8xf32>
    %7 = vector.shape_cast %6 : vector<2x1x8x8xf32> to vector<2x8x8xf32>
    %c0_10 = arith.constant 0 : index
    %8 = memref.load %arg1[%c0_10] : memref<108xf32, #tpu.memory_space<smem>>
    %9 = vector.broadcast %8 : f32 to vector<2x8x8xf32>
    %10 = arith.mulf %9, %7 : vector<2x8x8xf32>
    %11 = arith.addf %2, %10 : vector<2x8x8xf32>
    %c27 = arith.constant 27 : index
    %12 = memref.load %arg1[%c27] : memref<108xf32, #tpu.memory_space<smem>>
    %13 = vector.broadcast %12 : f32 to vector<2x8x8xf32>
    %14 = arith.mulf %13, %7 : vector<2x8x8xf32>
    %15 = arith.addf %3, %14 : vector<2x8x8xf32>
    %c54 = arith.constant 54 : index
    %16 = memref.load %arg1[%c54] : memref<108xf32, #tpu.memory_space<smem>>
    %17 = vector.broadcast %16 : f32 to vector<2x8x8xf32>
    %18 = arith.mulf %17, %7 : vector<2x8x8xf32>
    %19 = arith.addf %4, %18 : vector<2x8x8xf32>
    %c81 = arith.constant 81 : index
    %20 = memref.load %arg1[%c81] : memref<108xf32, #tpu.memory_space<smem>>
    %21 = vector.broadcast %20 : f32 to vector<2x8x8xf32>
    %22 = arith.mulf %21, %7 : vector<2x8x8xf32>
    %23 = arith.addf %5, %22 : vector<2x8x8xf32>
    %c0_11 = arith.constant 0 : index
    %c1 = arith.constant 1 : index
    %c0_12 = arith.constant 0 : index
    %c0_13 = arith.constant 0 : index
    %24 = vector.load %arg0[%c0_11, %c1, %c0_12, %c0_13] : memref<2x12x9x9xf32, #tpu.memory_space<vmem>>, vector<2x1x8x8xf32>
    %25 = vector.shape_cast %24 : vector<2x1x8x8xf32> to vector<2x8x8xf32>
    %c1_14 = arith.constant 1 : index
    %26 = memref.load %arg1[%c1_14] : memref<108xf32, #tpu.memory_space<smem>>
    %27 = vector.broadcast %26 : f32 to vector<2x8x8xf32>
    %28 = arith.mulf %27, %25 : vector<2x8x8xf32>
    %29 = arith.addf %11, %28 : vector<2x8x8xf32>
    %c28 = arith.constant 28 : index
    %30 = memref.load %arg1[%c28] : memref<108xf32, #tpu.memory_space<smem>>
    %31 = vector.broadcast %30 : f32 to vector<2x8x8xf32>
    %32 = arith.mulf %31, %25 : vector<2x8x8xf32>
    %33 = arith.addf %15, %32 : vector<2x8x8xf32>
    %c55 = arith.constant 55 : index
    %34 = memref.load %arg1[%c55] : memref<108xf32, #tpu.memory_space<smem>>
    %35 = vector.broadcast %34 : f32 to vector<2x8x8xf32>
    %36 = arith.mulf %35, %25 : vector<2x8x8xf32>
    %37 = arith.addf %19, %36 : vector<2x8x8xf32>
    %c82 = arith.constant 82 : index
    %38 = memref.load %arg1[%c82] : memref<108xf32, #tpu.memory_space<smem>>
    %39 = vector.broadcast %38 : f32 to vector<2x8x8xf32>
    %40 = arith.mulf %39, %25 : vector<2x8x8xf32>
    %41 = arith.addf %23, %40 : vector<2x8x8xf32>
    %c0_15 = arith.constant 0 : index
    %c0_16 = arith.constant 0 : index
    %c0_17 = arith.constant 0 : index
    %c1_18 = arith.constant 1 : index
    %42 = vector.load %arg0[%c0_15, %c0_16, %c0_17, %c1_18] : memref<2x12x9x9xf32, #tpu.memory_space<vmem>>, vector<2x1x8x8xf32>
    %43 = vector.shape_cast %42 : vector<2x1x8x8xf32> to vector<2x8x8xf32>
    %c2 = arith.constant 2 : index
    %44 = memref.load %arg1[%c2] : memref<108xf32, #tpu.memory_space<smem>>
    %45 = vector.broadcast %44 : f32 to vector<2x8x8xf32>
    %46 = arith.mulf %45, %43 : vector<2x8x8xf32>
    %47 = arith.addf %29, %46 : vector<2x8x8xf32>
    %c29 = arith.constant 29 : index
    %48 = memref.load %arg1[%c29] : memref<108xf32, #tpu.memory_space<smem>>
    %49 = vector.broadcast %48 : f32 to vector<2x8x8xf32>
    %50 = arith.mulf %49, %43 : vector<2x8x8xf32>
    %51 = arith.addf %33, %50 : vector<2x8x8xf32>
    %c56 = arith.constant 56 : index
    %52 = memref.load %arg1[%c56] : memref<108xf32, #tpu.memory_space<smem>>
    %53 = vector.broadcast %52 : f32 to vector<2x8x8xf32>
    %54 = arith.mulf %53, %43 : vector<2x8x8xf32>
    %55 = arith.addf %37, %54 : vector<2x8x8xf32>
    %c83 = arith.constant 83 : index
    %56 = memref.load %arg1[%c83] : memref<108xf32, #tpu.memory_space<smem>>
    %57 = vector.broadcast %56 : f32 to vector<2x8x8xf32>
    %58 = arith.mulf %57, %43 : vector<2x8x8xf32>
    %59 = arith.addf %41, %58 : vector<2x8x8xf32>
    %c0_19 = arith.constant 0 : index
    %c2_20 = arith.constant 2 : index
    %c0_21 = arith.constant 0 : index
    %c0_22 = arith.constant 0 : index
    %60 = vector.load %arg0[%c0_19, %c2_20, %c0_21, %c0_22] : memref<2x12x9x9xf32, #tpu.memory_space<vmem>>, vector<2x1x8x8xf32>
    %61 = vector.shape_cast %60 : vector<2x1x8x8xf32> to vector<2x8x8xf32>
    %c3 = arith.constant 3 : index
    %62 = memref.load %arg1[%c3] : memref<108xf32, #tpu.memory_space<smem>>
    %63 = vector.broadcast %62 : f32 to vector<2x8x8xf32>
    %64 = arith.mulf %63, %61 : vector<2x8x8xf32>
    %65 = arith.addf %47, %64 : vector<2x8x8xf32>
    %c30 = arith.constant 30 : index
    %66 = memref.load %arg1[%c30] : memref<108xf32, #tpu.memory_space<smem>>
    %67 = vector.broadcast %66 : f32 to vector<2x8x8xf32>
    %68 = arith.mulf %67, %61 : vector<2x8x8xf32>
    %69 = arith.addf %51, %68 : vector<2x8x8xf32>
    %c57 = arith.constant 57 : index
    %70 = memref.load %arg1[%c57] : memref<108xf32, #tpu.memory_space<smem>>
    %71 = vector.broadcast %70 : f32 to vector<2x8x8xf32>
    %72 = arith.mulf %71, %61 : vector<2x8x8xf32>
    %73 = arith.addf %55, %72 : vector<2x8x8xf32>
    %c84 = arith.constant 84 : index
    %74 = memref.load %arg1[%c84] : memref<108xf32, #tpu.memory_space<smem>>
    %75 = vector.broadcast %74 : f32 to vector<2x8x8xf32>
    %76 = arith.mulf %75, %61 : vector<2x8x8xf32>
    %77 = arith.addf %59, %76 : vector<2x8x8xf32>
    %c0_23 = arith.constant 0 : index
    %c3_24 = arith.constant 3 : index
    %c0_25 = arith.constant 0 : index
    %c0_26 = arith.constant 0 : index
    %78 = vector.load %arg0[%c0_23, %c3_24, %c0_25, %c0_26] : memref<2x12x9x9xf32, #tpu.memory_space<vmem>>, vector<2x1x8x8xf32>
    %79 = vector.shape_cast %78 : vector<2x1x8x8xf32> to vector<2x8x8xf32>
    %c4 = arith.constant 4 : index
    %80 = memref.load %arg1[%c4] : memref<108xf32, #tpu.memory_space<smem>>
    %81 = vector.broadcast %80 : f32 to vector<2x8x8xf32>
    %82 = arith.mulf %81, %79 : vector<2x8x8xf32>
    %83 = arith.addf %65, %82 : vector<2x8x8xf32>
    %c31 = arith.constant 31 : index
    %84 = memref.load %arg1[%c31] : memref<108xf32, #tpu.memory_space<smem>>
    %85 = vector.broadcast %84 : f32 to vector<2x8x8xf32>
    %86 = arith.mulf %85, %79 : vector<2x8x8xf32>
    %87 = arith.addf %69, %86 : vector<2x8x8xf32>
    %c58 = arith.constant 58 : index
    %88 = memref.load %arg1[%c58] : memref<108xf32, #tpu.memory_space<smem>>
    %89 = vector.broadcast %88 : f32 to vector<2x8x8xf32>
    %90 = arith.mulf %89, %79 : vector<2x8x8xf32>
    %91 = arith.addf %73, %90 : vector<2x8x8xf32>
    %c85 = arith.constant 85 : index
    %92 = memref.load %arg1[%c85] : memref<108xf32, #tpu.memory_space<smem>>
    %93 = vector.broadcast %92 : f32 to vector<2x8x8xf32>
    %94 = arith.mulf %93, %79 : vector<2x8x8xf32>
    %95 = arith.addf %77, %94 : vector<2x8x8xf32>
    %c0_27 = arith.constant 0 : index
    %c2_28 = arith.constant 2 : index
    %c0_29 = arith.constant 0 : index
    %c1_30 = arith.constant 1 : index
    %96 = vector.load %arg0[%c0_27, %c2_28, %c0_29, %c1_30] : memref<2x12x9x9xf32, #tpu.memory_space<vmem>>, vector<2x1x8x8xf32>
    %97 = vector.shape_cast %96 : vector<2x1x8x8xf32> to vector<2x8x8xf32>
    %c5 = arith.constant 5 : index
    %98 = memref.load %arg1[%c5] : memref<108xf32, #tpu.memory_space<smem>>
    %99 = vector.broadcast %98 : f32 to vector<2x8x8xf32>
    %100 = arith.mulf %99, %97 : vector<2x8x8xf32>
    %101 = arith.addf %83, %100 : vector<2x8x8xf32>
    %c32 = arith.constant 32 : index
    %102 = memref.load %arg1[%c32] : memref<108xf32, #tpu.memory_space<smem>>
    %103 = vector.broadcast %102 : f32 to vector<2x8x8xf32>
    %104 = arith.mulf %103, %97 : vector<2x8x8xf32>
    %105 = arith.addf %87, %104 : vector<2x8x8xf32>
    %c59 = arith.constant 59 : index
    %106 = memref.load %arg1[%c59] : memref<108xf32, #tpu.memory_space<smem>>
    %107 = vector.broadcast %106 : f32 to vector<2x8x8xf32>
    %108 = arith.mulf %107, %97 : vector<2x8x8xf32>
    %109 = arith.addf %91, %108 : vector<2x8x8xf32>
    %c86 = arith.constant 86 : index
    %110 = memref.load %arg1[%c86] : memref<108xf32, #tpu.memory_space<smem>>
    %111 = vector.broadcast %110 : f32 to vector<2x8x8xf32>
    %112 = arith.mulf %111, %97 : vector<2x8x8xf32>
    %113 = arith.addf %95, %112 : vector<2x8x8xf32>
    %c0_31 = arith.constant 0 : index
    %c0_32 = arith.constant 0 : index
    %c1_33 = arith.constant 1 : index
    %c0_34 = arith.constant 0 : index
    %114 = vector.load %arg0[%c0_31, %c0_32, %c1_33, %c0_34] : memref<2x12x9x9xf32, #tpu.memory_space<vmem>>, vector<2x1x8x8xf32>
    %115 = vector.shape_cast %114 : vector<2x1x8x8xf32> to vector<2x8x8xf32>
    %c6 = arith.constant 6 : index
    %116 = memref.load %arg1[%c6] : memref<108xf32, #tpu.memory_space<smem>>
    %117 = vector.broadcast %116 : f32 to vector<2x8x8xf32>
    %118 = arith.mulf %117, %115 : vector<2x8x8xf32>
    %119 = arith.addf %101, %118 : vector<2x8x8xf32>
    %c33 = arith.constant 33 : index
    %120 = memref.load %arg1[%c33] : memref<108xf32, #tpu.memory_space<smem>>
    %121 = vector.broadcast %120 : f32 to vector<2x8x8xf32>
    %122 = arith.mulf %121, %115 : vector<2x8x8xf32>
    %123 = arith.addf %105, %122 : vector<2x8x8xf32>
    %c60 = arith.constant 60 : index
    %124 = memref.load %arg1[%c60] : memref<108xf32, #tpu.memory_space<smem>>
    %125 = vector.broadcast %124 : f32 to vector<2x8x8xf32>
    %126 = arith.mulf %125, %115 : vector<2x8x8xf32>
    %127 = arith.addf %109, %126 : vector<2x8x8xf32>
    %c87 = arith.constant 87 : index
    %128 = memref.load %arg1[%c87] : memref<108xf32, #tpu.memory_space<smem>>
    %129 = vector.broadcast %128 : f32 to vector<2x8x8xf32>
    %130 = arith.mulf %129, %115 : vector<2x8x8xf32>
    %131 = arith.addf %113, %130 : vector<2x8x8xf32>
    %c0_35 = arith.constant 0 : index
    %c1_36 = arith.constant 1 : index
    %c1_37 = arith.constant 1 : index
    %c0_38 = arith.constant 0 : index
    %132 = vector.load %arg0[%c0_35, %c1_36, %c1_37, %c0_38] : memref<2x12x9x9xf32, #tpu.memory_space<vmem>>, vector<2x1x8x8xf32>
    %133 = vector.shape_cast %132 : vector<2x1x8x8xf32> to vector<2x8x8xf32>
    %c7 = arith.constant 7 : index
    %134 = memref.load %arg1[%c7] : memref<108xf32, #tpu.memory_space<smem>>
    %135 = vector.broadcast %134 : f32 to vector<2x8x8xf32>
    %136 = arith.mulf %135, %133 : vector<2x8x8xf32>
    %137 = arith.addf %119, %136 : vector<2x8x8xf32>
    %c34 = arith.constant 34 : index
    %138 = memref.load %arg1[%c34] : memref<108xf32, #tpu.memory_space<smem>>
    %139 = vector.broadcast %138 : f32 to vector<2x8x8xf32>
    %140 = arith.mulf %139, %133 : vector<2x8x8xf32>
    %141 = arith.addf %123, %140 : vector<2x8x8xf32>
    %c61 = arith.constant 61 : index
    %142 = memref.load %arg1[%c61] : memref<108xf32, #tpu.memory_space<smem>>
    %143 = vector.broadcast %142 : f32 to vector<2x8x8xf32>
    %144 = arith.mulf %143, %133 : vector<2x8x8xf32>
    %145 = arith.addf %127, %144 : vector<2x8x8xf32>
    %c88 = arith.constant 88 : index
    %146 = memref.load %arg1[%c88] : memref<108xf32, #tpu.memory_space<smem>>
    %147 = vector.broadcast %146 : f32 to vector<2x8x8xf32>
    %148 = arith.mulf %147, %133 : vector<2x8x8xf32>
    %149 = arith.addf %131, %148 : vector<2x8x8xf32>
    %c0_39 = arith.constant 0 : index
    %c0_40 = arith.constant 0 : index
    %c1_41 = arith.constant 1 : index
    %c1_42 = arith.constant 1 : index
    %150 = vector.load %arg0[%c0_39, %c0_40, %c1_41, %c1_42] : memref<2x12x9x9xf32, #tpu.memory_space<vmem>>, vector<2x1x8x8xf32>
    %151 = vector.shape_cast %150 : vector<2x1x8x8xf32> to vector<2x8x8xf32>
    %c8 = arith.constant 8 : index
    %152 = memref.load %arg1[%c8] : memref<108xf32, #tpu.memory_space<smem>>
    %153 = vector.broadcast %152 : f32 to vector<2x8x8xf32>
    %154 = arith.mulf %153, %151 : vector<2x8x8xf32>
    %155 = arith.addf %137, %154 : vector<2x8x8xf32>
    %c35 = arith.constant 35 : index
    %156 = memref.load %arg1[%c35] : memref<108xf32, #tpu.memory_space<smem>>
    %157 = vector.broadcast %156 : f32 to vector<2x8x8xf32>
    %158 = arith.mulf %157, %151 : vector<2x8x8xf32>
    %159 = arith.addf %141, %158 : vector<2x8x8xf32>
    %c62 = arith.constant 62 : index
    %160 = memref.load %arg1[%c62] : memref<108xf32, #tpu.memory_space<smem>>
    %161 = vector.broadcast %160 : f32 to vector<2x8x8xf32>
    %162 = arith.mulf %161, %151 : vector<2x8x8xf32>
    %163 = arith.addf %145, %162 : vector<2x8x8xf32>
    %c89 = arith.constant 89 : index
    %164 = memref.load %arg1[%c89] : memref<108xf32, #tpu.memory_space<smem>>
    %165 = vector.broadcast %164 : f32 to vector<2x8x8xf32>
    %166 = arith.mulf %165, %151 : vector<2x8x8xf32>
    %167 = arith.addf %149, %166 : vector<2x8x8xf32>
    %c0_43 = arith.constant 0 : index
    %c4_44 = arith.constant 4 : index
    %c0_45 = arith.constant 0 : index
    %c0_46 = arith.constant 0 : index
    %168 = vector.load %arg0[%c0_43, %c4_44, %c0_45, %c0_46] : memref<2x12x9x9xf32, #tpu.memory_space<vmem>>, vector<2x1x8x8xf32>
    %169 = vector.shape_cast %168 : vector<2x1x8x8xf32> to vector<2x8x8xf32>
    %c9 = arith.constant 9 : index
    %170 = memref.load %arg1[%c9] : memref<108xf32, #tpu.memory_space<smem>>
    %171 = vector.broadcast %170 : f32 to vector<2x8x8xf32>
    %172 = arith.mulf %171, %169 : vector<2x8x8xf32>
    %173 = arith.addf %155, %172 : vector<2x8x8xf32>
    %c36 = arith.constant 36 : index
    %174 = memref.load %arg1[%c36] : memref<108xf32, #tpu.memory_space<smem>>
    %175 = vector.broadcast %174 : f32 to vector<2x8x8xf32>
    %176 = arith.mulf %175, %169 : vector<2x8x8xf32>
    %177 = arith.addf %159, %176 : vector<2x8x8xf32>
    %c63 = arith.constant 63 : index
    %178 = memref.load %arg1[%c63] : memref<108xf32, #tpu.memory_space<smem>>
    %179 = vector.broadcast %178 : f32 to vector<2x8x8xf32>
    %180 = arith.mulf %179, %169 : vector<2x8x8xf32>
    %181 = arith.addf %163, %180 : vector<2x8x8xf32>
    %c90 = arith.constant 90 : index
    %182 = memref.load %arg1[%c90] : memref<108xf32, #tpu.memory_space<smem>>
    %183 = vector.broadcast %182 : f32 to vector<2x8x8xf32>
    %184 = arith.mulf %183, %169 : vector<2x8x8xf32>
    %185 = arith.addf %167, %184 : vector<2x8x8xf32>
    %c0_47 = arith.constant 0 : index
    %c5_48 = arith.constant 5 : index
    %c0_49 = arith.constant 0 : index
    %c0_50 = arith.constant 0 : index
    %186 = vector.load %arg0[%c0_47, %c5_48, %c0_49, %c0_50] : memref<2x12x9x9xf32, #tpu.memory_space<vmem>>, vector<2x1x8x8xf32>
    %187 = vector.shape_cast %186 : vector<2x1x8x8xf32> to vector<2x8x8xf32>
    %c10 = arith.constant 10 : index
    %188 = memref.load %arg1[%c10] : memref<108xf32, #tpu.memory_space<smem>>
    %189 = vector.broadcast %188 : f32 to vector<2x8x8xf32>
    %190 = arith.mulf %189, %187 : vector<2x8x8xf32>
    %191 = arith.addf %173, %190 : vector<2x8x8xf32>
    %c37 = arith.constant 37 : index
    %192 = memref.load %arg1[%c37] : memref<108xf32, #tpu.memory_space<smem>>
    %193 = vector.broadcast %192 : f32 to vector<2x8x8xf32>
    %194 = arith.mulf %193, %187 : vector<2x8x8xf32>
    %195 = arith.addf %177, %194 : vector<2x8x8xf32>
    %c64 = arith.constant 64 : index
    %196 = memref.load %arg1[%c64] : memref<108xf32, #tpu.memory_space<smem>>
    %197 = vector.broadcast %196 : f32 to vector<2x8x8xf32>
    %198 = arith.mulf %197, %187 : vector<2x8x8xf32>
    %199 = arith.addf %181, %198 : vector<2x8x8xf32>
    %c91 = arith.constant 91 : index
    %200 = memref.load %arg1[%c91] : memref<108xf32, #tpu.memory_space<smem>>
    %201 = vector.broadcast %200 : f32 to vector<2x8x8xf32>
    %202 = arith.mulf %201, %187 : vector<2x8x8xf32>
    %203 = arith.addf %185, %202 : vector<2x8x8xf32>
    %c0_51 = arith.constant 0 : index
    %c4_52 = arith.constant 4 : index
    %c0_53 = arith.constant 0 : index
    %c1_54 = arith.constant 1 : index
    %204 = vector.load %arg0[%c0_51, %c4_52, %c0_53, %c1_54] : memref<2x12x9x9xf32, #tpu.memory_space<vmem>>, vector<2x1x8x8xf32>
    %205 = vector.shape_cast %204 : vector<2x1x8x8xf32> to vector<2x8x8xf32>
    %c11 = arith.constant 11 : index
    %206 = memref.load %arg1[%c11] : memref<108xf32, #tpu.memory_space<smem>>
    %207 = vector.broadcast %206 : f32 to vector<2x8x8xf32>
    %208 = arith.mulf %207, %205 : vector<2x8x8xf32>
    %209 = arith.addf %191, %208 : vector<2x8x8xf32>
    %c38 = arith.constant 38 : index
    %210 = memref.load %arg1[%c38] : memref<108xf32, #tpu.memory_space<smem>>
    %211 = vector.broadcast %210 : f32 to vector<2x8x8xf32>
    %212 = arith.mulf %211, %205 : vector<2x8x8xf32>
    %213 = arith.addf %195, %212 : vector<2x8x8xf32>
    %c65 = arith.constant 65 : index
    %214 = memref.load %arg1[%c65] : memref<108xf32, #tpu.memory_space<smem>>
    %215 = vector.broadcast %214 : f32 to vector<2x8x8xf32>
    %216 = arith.mulf %215, %205 : vector<2x8x8xf32>
    %217 = arith.addf %199, %216 : vector<2x8x8xf32>
    %c92 = arith.constant 92 : index
    %218 = memref.load %arg1[%c92] : memref<108xf32, #tpu.memory_space<smem>>
    %219 = vector.broadcast %218 : f32 to vector<2x8x8xf32>
    %220 = arith.mulf %219, %205 : vector<2x8x8xf32>
    %221 = arith.addf %203, %220 : vector<2x8x8xf32>
    %c0_55 = arith.constant 0 : index
    %c6_56 = arith.constant 6 : index
    %c0_57 = arith.constant 0 : index
    %c0_58 = arith.constant 0 : index
    %222 = vector.load %arg0[%c0_55, %c6_56, %c0_57, %c0_58] : memref<2x12x9x9xf32, #tpu.memory_space<vmem>>, vector<2x1x8x8xf32>
    %223 = vector.shape_cast %222 : vector<2x1x8x8xf32> to vector<2x8x8xf32>
    %c12 = arith.constant 12 : index
    %224 = memref.load %arg1[%c12] : memref<108xf32, #tpu.memory_space<smem>>
    %225 = vector.broadcast %224 : f32 to vector<2x8x8xf32>
    %226 = arith.mulf %225, %223 : vector<2x8x8xf32>
    %227 = arith.addf %209, %226 : vector<2x8x8xf32>
    %c39 = arith.constant 39 : index
    %228 = memref.load %arg1[%c39] : memref<108xf32, #tpu.memory_space<smem>>
    %229 = vector.broadcast %228 : f32 to vector<2x8x8xf32>
    %230 = arith.mulf %229, %223 : vector<2x8x8xf32>
    %231 = arith.addf %213, %230 : vector<2x8x8xf32>
    %c66 = arith.constant 66 : index
    %232 = memref.load %arg1[%c66] : memref<108xf32, #tpu.memory_space<smem>>
    %233 = vector.broadcast %232 : f32 to vector<2x8x8xf32>
    %234 = arith.mulf %233, %223 : vector<2x8x8xf32>
    %235 = arith.addf %217, %234 : vector<2x8x8xf32>
    %c93 = arith.constant 93 : index
    %236 = memref.load %arg1[%c93] : memref<108xf32, #tpu.memory_space<smem>>
    %237 = vector.broadcast %236 : f32 to vector<2x8x8xf32>
    %238 = arith.mulf %237, %223 : vector<2x8x8xf32>
    %239 = arith.addf %221, %238 : vector<2x8x8xf32>
    %c0_59 = arith.constant 0 : index
    %c7_60 = arith.constant 7 : index
    %c0_61 = arith.constant 0 : index
    %c0_62 = arith.constant 0 : index
    %240 = vector.load %arg0[%c0_59, %c7_60, %c0_61, %c0_62] : memref<2x12x9x9xf32, #tpu.memory_space<vmem>>, vector<2x1x8x8xf32>
    %241 = vector.shape_cast %240 : vector<2x1x8x8xf32> to vector<2x8x8xf32>
    %c13 = arith.constant 13 : index
    %242 = memref.load %arg1[%c13] : memref<108xf32, #tpu.memory_space<smem>>
    %243 = vector.broadcast %242 : f32 to vector<2x8x8xf32>
    %244 = arith.mulf %243, %241 : vector<2x8x8xf32>
    %245 = arith.addf %227, %244 : vector<2x8x8xf32>
    %c40 = arith.constant 40 : index
    %246 = memref.load %arg1[%c40] : memref<108xf32, #tpu.memory_space<smem>>
    %247 = vector.broadcast %246 : f32 to vector<2x8x8xf32>
    %248 = arith.mulf %247, %241 : vector<2x8x8xf32>
    %249 = arith.addf %231, %248 : vector<2x8x8xf32>
    %c67 = arith.constant 67 : index
    %250 = memref.load %arg1[%c67] : memref<108xf32, #tpu.memory_space<smem>>
    %251 = vector.broadcast %250 : f32 to vector<2x8x8xf32>
    %252 = arith.mulf %251, %241 : vector<2x8x8xf32>
    %253 = arith.addf %235, %252 : vector<2x8x8xf32>
    %c94 = arith.constant 94 : index
    %254 = memref.load %arg1[%c94] : memref<108xf32, #tpu.memory_space<smem>>
    %255 = vector.broadcast %254 : f32 to vector<2x8x8xf32>
    %256 = arith.mulf %255, %241 : vector<2x8x8xf32>
    %257 = arith.addf %239, %256 : vector<2x8x8xf32>
    %c0_63 = arith.constant 0 : index
    %c6_64 = arith.constant 6 : index
    %c0_65 = arith.constant 0 : index
    %c1_66 = arith.constant 1 : index
    %258 = vector.load %arg0[%c0_63, %c6_64, %c0_65, %c1_66] : memref<2x12x9x9xf32, #tpu.memory_space<vmem>>, vector<2x1x8x8xf32>
    %259 = vector.shape_cast %258 : vector<2x1x8x8xf32> to vector<2x8x8xf32>
    %c14 = arith.constant 14 : index
    %260 = memref.load %arg1[%c14] : memref<108xf32, #tpu.memory_space<smem>>
    %261 = vector.broadcast %260 : f32 to vector<2x8x8xf32>
    %262 = arith.mulf %261, %259 : vector<2x8x8xf32>
    %263 = arith.addf %245, %262 : vector<2x8x8xf32>
    %c41 = arith.constant 41 : index
    %264 = memref.load %arg1[%c41] : memref<108xf32, #tpu.memory_space<smem>>
    %265 = vector.broadcast %264 : f32 to vector<2x8x8xf32>
    %266 = arith.mulf %265, %259 : vector<2x8x8xf32>
    %267 = arith.addf %249, %266 : vector<2x8x8xf32>
    %c68 = arith.constant 68 : index
    %268 = memref.load %arg1[%c68] : memref<108xf32, #tpu.memory_space<smem>>
    %269 = vector.broadcast %268 : f32 to vector<2x8x8xf32>
    %270 = arith.mulf %269, %259 : vector<2x8x8xf32>
    %271 = arith.addf %253, %270 : vector<2x8x8xf32>
    %c95 = arith.constant 95 : index
    %272 = memref.load %arg1[%c95] : memref<108xf32, #tpu.memory_space<smem>>
    %273 = vector.broadcast %272 : f32 to vector<2x8x8xf32>
    %274 = arith.mulf %273, %259 : vector<2x8x8xf32>
    %275 = arith.addf %257, %274 : vector<2x8x8xf32>
    %c0_67 = arith.constant 0 : index
    %c4_68 = arith.constant 4 : index
    %c1_69 = arith.constant 1 : index
    %c0_70 = arith.constant 0 : index
    %276 = vector.load %arg0[%c0_67, %c4_68, %c1_69, %c0_70] : memref<2x12x9x9xf32, #tpu.memory_space<vmem>>, vector<2x1x8x8xf32>
    %277 = vector.shape_cast %276 : vector<2x1x8x8xf32> to vector<2x8x8xf32>
    %c15 = arith.constant 15 : index
    %278 = memref.load %arg1[%c15] : memref<108xf32, #tpu.memory_space<smem>>
    %279 = vector.broadcast %278 : f32 to vector<2x8x8xf32>
    %280 = arith.mulf %279, %277 : vector<2x8x8xf32>
    %281 = arith.addf %263, %280 : vector<2x8x8xf32>
    %c42 = arith.constant 42 : index
    %282 = memref.load %arg1[%c42] : memref<108xf32, #tpu.memory_space<smem>>
    %283 = vector.broadcast %282 : f32 to vector<2x8x8xf32>
    %284 = arith.mulf %283, %277 : vector<2x8x8xf32>
    %285 = arith.addf %267, %284 : vector<2x8x8xf32>
    %c69 = arith.constant 69 : index
    %286 = memref.load %arg1[%c69] : memref<108xf32, #tpu.memory_space<smem>>
    %287 = vector.broadcast %286 : f32 to vector<2x8x8xf32>
    %288 = arith.mulf %287, %277 : vector<2x8x8xf32>
    %289 = arith.addf %271, %288 : vector<2x8x8xf32>
    %c96 = arith.constant 96 : index
    %290 = memref.load %arg1[%c96] : memref<108xf32, #tpu.memory_space<smem>>
    %291 = vector.broadcast %290 : f32 to vector<2x8x8xf32>
    %292 = arith.mulf %291, %277 : vector<2x8x8xf32>
    %293 = arith.addf %275, %292 : vector<2x8x8xf32>
    %c0_71 = arith.constant 0 : index
    %c5_72 = arith.constant 5 : index
    %c1_73 = arith.constant 1 : index
    %c0_74 = arith.constant 0 : index
    %294 = vector.load %arg0[%c0_71, %c5_72, %c1_73, %c0_74] : memref<2x12x9x9xf32, #tpu.memory_space<vmem>>, vector<2x1x8x8xf32>
    %295 = vector.shape_cast %294 : vector<2x1x8x8xf32> to vector<2x8x8xf32>
    %c16 = arith.constant 16 : index
    %296 = memref.load %arg1[%c16] : memref<108xf32, #tpu.memory_space<smem>>
    %297 = vector.broadcast %296 : f32 to vector<2x8x8xf32>
    %298 = arith.mulf %297, %295 : vector<2x8x8xf32>
    %299 = arith.addf %281, %298 : vector<2x8x8xf32>
    %c43 = arith.constant 43 : index
    %300 = memref.load %arg1[%c43] : memref<108xf32, #tpu.memory_space<smem>>
    %301 = vector.broadcast %300 : f32 to vector<2x8x8xf32>
    %302 = arith.mulf %301, %295 : vector<2x8x8xf32>
    %303 = arith.addf %285, %302 : vector<2x8x8xf32>
    %c70 = arith.constant 70 : index
    %304 = memref.load %arg1[%c70] : memref<108xf32, #tpu.memory_space<smem>>
    %305 = vector.broadcast %304 : f32 to vector<2x8x8xf32>
    %306 = arith.mulf %305, %295 : vector<2x8x8xf32>
    %307 = arith.addf %289, %306 : vector<2x8x8xf32>
    %c97 = arith.constant 97 : index
    %308 = memref.load %arg1[%c97] : memref<108xf32, #tpu.memory_space<smem>>
    %309 = vector.broadcast %308 : f32 to vector<2x8x8xf32>
    %310 = arith.mulf %309, %295 : vector<2x8x8xf32>
    %311 = arith.addf %293, %310 : vector<2x8x8xf32>
    %c0_75 = arith.constant 0 : index
    %c4_76 = arith.constant 4 : index
    %c1_77 = arith.constant 1 : index
    %c1_78 = arith.constant 1 : index
    %312 = vector.load %arg0[%c0_75, %c4_76, %c1_77, %c1_78] : memref<2x12x9x9xf32, #tpu.memory_space<vmem>>, vector<2x1x8x8xf32>
    %313 = vector.shape_cast %312 : vector<2x1x8x8xf32> to vector<2x8x8xf32>
    %c17 = arith.constant 17 : index
    %314 = memref.load %arg1[%c17] : memref<108xf32, #tpu.memory_space<smem>>
    %315 = vector.broadcast %314 : f32 to vector<2x8x8xf32>
    %316 = arith.mulf %315, %313 : vector<2x8x8xf32>
    %317 = arith.addf %299, %316 : vector<2x8x8xf32>
    %c44 = arith.constant 44 : index
    %318 = memref.load %arg1[%c44] : memref<108xf32, #tpu.memory_space<smem>>
    %319 = vector.broadcast %318 : f32 to vector<2x8x8xf32>
    %320 = arith.mulf %319, %313 : vector<2x8x8xf32>
    %321 = arith.addf %303, %320 : vector<2x8x8xf32>
    %c71 = arith.constant 71 : index
    %322 = memref.load %arg1[%c71] : memref<108xf32, #tpu.memory_space<smem>>
    %323 = vector.broadcast %322 : f32 to vector<2x8x8xf32>
    %324 = arith.mulf %323, %313 : vector<2x8x8xf32>
    %325 = arith.addf %307, %324 : vector<2x8x8xf32>
    %c98 = arith.constant 98 : index
    %326 = memref.load %arg1[%c98] : memref<108xf32, #tpu.memory_space<smem>>
    %327 = vector.broadcast %326 : f32 to vector<2x8x8xf32>
    %328 = arith.mulf %327, %313 : vector<2x8x8xf32>
    %329 = arith.addf %311, %328 : vector<2x8x8xf32>
    %c0_79 = arith.constant 0 : index
    %c8_80 = arith.constant 8 : index
    %c0_81 = arith.constant 0 : index
    %c0_82 = arith.constant 0 : index
    %330 = vector.load %arg0[%c0_79, %c8_80, %c0_81, %c0_82] : memref<2x12x9x9xf32, #tpu.memory_space<vmem>>, vector<2x1x8x8xf32>
    %331 = vector.shape_cast %330 : vector<2x1x8x8xf32> to vector<2x8x8xf32>
    %c18 = arith.constant 18 : index
    %332 = memref.load %arg1[%c18] : memref<108xf32, #tpu.memory_space<smem>>
    %333 = vector.broadcast %332 : f32 to vector<2x8x8xf32>
    %334 = arith.mulf %333, %331 : vector<2x8x8xf32>
    %335 = arith.addf %317, %334 : vector<2x8x8xf32>
    %c45 = arith.constant 45 : index
    %336 = memref.load %arg1[%c45] : memref<108xf32, #tpu.memory_space<smem>>
    %337 = vector.broadcast %336 : f32 to vector<2x8x8xf32>
    %338 = arith.mulf %337, %331 : vector<2x8x8xf32>
    %339 = arith.addf %321, %338 : vector<2x8x8xf32>
    %c72 = arith.constant 72 : index
    %340 = memref.load %arg1[%c72] : memref<108xf32, #tpu.memory_space<smem>>
    %341 = vector.broadcast %340 : f32 to vector<2x8x8xf32>
    %342 = arith.mulf %341, %331 : vector<2x8x8xf32>
    %343 = arith.addf %325, %342 : vector<2x8x8xf32>
    %c99 = arith.constant 99 : index
    %344 = memref.load %arg1[%c99] : memref<108xf32, #tpu.memory_space<smem>>
    %345 = vector.broadcast %344 : f32 to vector<2x8x8xf32>
    %346 = arith.mulf %345, %331 : vector<2x8x8xf32>
    %347 = arith.addf %329, %346 : vector<2x8x8xf32>
    %c0_83 = arith.constant 0 : index
    %c9_84 = arith.constant 9 : index
    %c0_85 = arith.constant 0 : index
    %c0_86 = arith.constant 0 : index
    %348 = vector.load %arg0[%c0_83, %c9_84, %c0_85, %c0_86] : memref<2x12x9x9xf32, #tpu.memory_space<vmem>>, vector<2x1x8x8xf32>
    %349 = vector.shape_cast %348 : vector<2x1x8x8xf32> to vector<2x8x8xf32>
    %c19 = arith.constant 19 : index
    %350 = memref.load %arg1[%c19] : memref<108xf32, #tpu.memory_space<smem>>
    %351 = vector.broadcast %350 : f32 to vector<2x8x8xf32>
    %352 = arith.mulf %351, %349 : vector<2x8x8xf32>
    %353 = arith.addf %335, %352 : vector<2x8x8xf32>
    %c46 = arith.constant 46 : index
    %354 = memref.load %arg1[%c46] : memref<108xf32, #tpu.memory_space<smem>>
    %355 = vector.broadcast %354 : f32 to vector<2x8x8xf32>
    %356 = arith.mulf %355, %349 : vector<2x8x8xf32>
    %357 = arith.addf %339, %356 : vector<2x8x8xf32>
    %c73 = arith.constant 73 : index
    %358 = memref.load %arg1[%c73] : memref<108xf32, #tpu.memory_space<smem>>
    %359 = vector.broadcast %358 : f32 to vector<2x8x8xf32>
    %360 = arith.mulf %359, %349 : vector<2x8x8xf32>
    %361 = arith.addf %343, %360 : vector<2x8x8xf32>
    %c100 = arith.constant 100 : index
    %362 = memref.load %arg1[%c100] : memref<108xf32, #tpu.memory_space<smem>>
    %363 = vector.broadcast %362 : f32 to vector<2x8x8xf32>
    %364 = arith.mulf %363, %349 : vector<2x8x8xf32>
    %365 = arith.addf %347, %364 : vector<2x8x8xf32>
    %c0_87 = arith.constant 0 : index
    %c8_88 = arith.constant 8 : index
    %c0_89 = arith.constant 0 : index
    %c1_90 = arith.constant 1 : index
    %366 = vector.load %arg0[%c0_87, %c8_88, %c0_89, %c1_90] : memref<2x12x9x9xf32, #tpu.memory_space<vmem>>, vector<2x1x8x8xf32>
    %367 = vector.shape_cast %366 : vector<2x1x8x8xf32> to vector<2x8x8xf32>
    %c20 = arith.constant 20 : index
    %368 = memref.load %arg1[%c20] : memref<108xf32, #tpu.memory_space<smem>>
    %369 = vector.broadcast %368 : f32 to vector<2x8x8xf32>
    %370 = arith.mulf %369, %367 : vector<2x8x8xf32>
    %371 = arith.addf %353, %370 : vector<2x8x8xf32>
    %c47 = arith.constant 47 : index
    %372 = memref.load %arg1[%c47] : memref<108xf32, #tpu.memory_space<smem>>
    %373 = vector.broadcast %372 : f32 to vector<2x8x8xf32>
    %374 = arith.mulf %373, %367 : vector<2x8x8xf32>
    %375 = arith.addf %357, %374 : vector<2x8x8xf32>
    %c74 = arith.constant 74 : index
    %376 = memref.load %arg1[%c74] : memref<108xf32, #tpu.memory_space<smem>>
    %377 = vector.broadcast %376 : f32 to vector<2x8x8xf32>
    %378 = arith.mulf %377, %367 : vector<2x8x8xf32>
    %379 = arith.addf %361, %378 : vector<2x8x8xf32>
    %c101 = arith.constant 101 : index
    %380 = memref.load %arg1[%c101] : memref<108xf32, #tpu.memory_space<smem>>
    %381 = vector.broadcast %380 : f32 to vector<2x8x8xf32>
    %382 = arith.mulf %381, %367 : vector<2x8x8xf32>
    %383 = arith.addf %365, %382 : vector<2x8x8xf32>
    %c0_91 = arith.constant 0 : index
    %c10_92 = arith.constant 10 : index
    %c0_93 = arith.constant 0 : index
    %c0_94 = arith.constant 0 : index
    %384 = vector.load %arg0[%c0_91, %c10_92, %c0_93, %c0_94] : memref<2x12x9x9xf32, #tpu.memory_space<vmem>>, vector<2x1x8x8xf32>
    %385 = vector.shape_cast %384 : vector<2x1x8x8xf32> to vector<2x8x8xf32>
    %c21 = arith.constant 21 : index
    %386 = memref.load %arg1[%c21] : memref<108xf32, #tpu.memory_space<smem>>
    %387 = vector.broadcast %386 : f32 to vector<2x8x8xf32>
    %388 = arith.mulf %387, %385 : vector<2x8x8xf32>
    %389 = arith.addf %371, %388 : vector<2x8x8xf32>
    %c48 = arith.constant 48 : index
    %390 = memref.load %arg1[%c48] : memref<108xf32, #tpu.memory_space<smem>>
    %391 = vector.broadcast %390 : f32 to vector<2x8x8xf32>
    %392 = arith.mulf %391, %385 : vector<2x8x8xf32>
    %393 = arith.addf %375, %392 : vector<2x8x8xf32>
    %c75 = arith.constant 75 : index
    %394 = memref.load %arg1[%c75] : memref<108xf32, #tpu.memory_space<smem>>
    %395 = vector.broadcast %394 : f32 to vector<2x8x8xf32>
    %396 = arith.mulf %395, %385 : vector<2x8x8xf32>
    %397 = arith.addf %379, %396 : vector<2x8x8xf32>
    %c102 = arith.constant 102 : index
    %398 = memref.load %arg1[%c102] : memref<108xf32, #tpu.memory_space<smem>>
    %399 = vector.broadcast %398 : f32 to vector<2x8x8xf32>
    %400 = arith.mulf %399, %385 : vector<2x8x8xf32>
    %401 = arith.addf %383, %400 : vector<2x8x8xf32>
    %c0_95 = arith.constant 0 : index
    %c11_96 = arith.constant 11 : index
    %c0_97 = arith.constant 0 : index
    %c0_98 = arith.constant 0 : index
    %402 = vector.load %arg0[%c0_95, %c11_96, %c0_97, %c0_98] : memref<2x12x9x9xf32, #tpu.memory_space<vmem>>, vector<2x1x8x8xf32>
    %403 = vector.shape_cast %402 : vector<2x1x8x8xf32> to vector<2x8x8xf32>
    %c22 = arith.constant 22 : index
    %404 = memref.load %arg1[%c22] : memref<108xf32, #tpu.memory_space<smem>>
    %405 = vector.broadcast %404 : f32 to vector<2x8x8xf32>
    %406 = arith.mulf %405, %403 : vector<2x8x8xf32>
    %407 = arith.addf %389, %406 : vector<2x8x8xf32>
    %c49 = arith.constant 49 : index
    %408 = memref.load %arg1[%c49] : memref<108xf32, #tpu.memory_space<smem>>
    %409 = vector.broadcast %408 : f32 to vector<2x8x8xf32>
    %410 = arith.mulf %409, %403 : vector<2x8x8xf32>
    %411 = arith.addf %393, %410 : vector<2x8x8xf32>
    %c76 = arith.constant 76 : index
    %412 = memref.load %arg1[%c76] : memref<108xf32, #tpu.memory_space<smem>>
    %413 = vector.broadcast %412 : f32 to vector<2x8x8xf32>
    %414 = arith.mulf %413, %403 : vector<2x8x8xf32>
    %415 = arith.addf %397, %414 : vector<2x8x8xf32>
    %c103 = arith.constant 103 : index
    %416 = memref.load %arg1[%c103] : memref<108xf32, #tpu.memory_space<smem>>
    %417 = vector.broadcast %416 : f32 to vector<2x8x8xf32>
    %418 = arith.mulf %417, %403 : vector<2x8x8xf32>
    %419 = arith.addf %401, %418 : vector<2x8x8xf32>
    %c0_99 = arith.constant 0 : index
    %c10_100 = arith.constant 10 : index
    %c0_101 = arith.constant 0 : index
    %c1_102 = arith.constant 1 : index
    %420 = vector.load %arg0[%c0_99, %c10_100, %c0_101, %c1_102] : memref<2x12x9x9xf32, #tpu.memory_space<vmem>>, vector<2x1x8x8xf32>
    %421 = vector.shape_cast %420 : vector<2x1x8x8xf32> to vector<2x8x8xf32>
    %c23 = arith.constant 23 : index
    %422 = memref.load %arg1[%c23] : memref<108xf32, #tpu.memory_space<smem>>
    %423 = vector.broadcast %422 : f32 to vector<2x8x8xf32>
    %424 = arith.mulf %423, %421 : vector<2x8x8xf32>
    %425 = arith.addf %407, %424 : vector<2x8x8xf32>
    %c50 = arith.constant 50 : index
    %426 = memref.load %arg1[%c50] : memref<108xf32, #tpu.memory_space<smem>>
    %427 = vector.broadcast %426 : f32 to vector<2x8x8xf32>
    %428 = arith.mulf %427, %421 : vector<2x8x8xf32>
    %429 = arith.addf %411, %428 : vector<2x8x8xf32>
    %c77 = arith.constant 77 : index
    %430 = memref.load %arg1[%c77] : memref<108xf32, #tpu.memory_space<smem>>
    %431 = vector.broadcast %430 : f32 to vector<2x8x8xf32>
    %432 = arith.mulf %431, %421 : vector<2x8x8xf32>
    %433 = arith.addf %415, %432 : vector<2x8x8xf32>
    %c104 = arith.constant 104 : index
    %434 = memref.load %arg1[%c104] : memref<108xf32, #tpu.memory_space<smem>>
    %435 = vector.broadcast %434 : f32 to vector<2x8x8xf32>
    %436 = arith.mulf %435, %421 : vector<2x8x8xf32>
    %437 = arith.addf %419, %436 : vector<2x8x8xf32>
    %c0_103 = arith.constant 0 : index
    %c8_104 = arith.constant 8 : index
    %c1_105 = arith.constant 1 : index
    %c0_106 = arith.constant 0 : index
    %438 = vector.load %arg0[%c0_103, %c8_104, %c1_105, %c0_106] : memref<2x12x9x9xf32, #tpu.memory_space<vmem>>, vector<2x1x8x8xf32>
    %439 = vector.shape_cast %438 : vector<2x1x8x8xf32> to vector<2x8x8xf32>
    %c24 = arith.constant 24 : index
    %440 = memref.load %arg1[%c24] : memref<108xf32, #tpu.memory_space<smem>>
    %441 = vector.broadcast %440 : f32 to vector<2x8x8xf32>
    %442 = arith.mulf %441, %439 : vector<2x8x8xf32>
    %443 = arith.addf %425, %442 : vector<2x8x8xf32>
    %c51 = arith.constant 51 : index
    %444 = memref.load %arg1[%c51] : memref<108xf32, #tpu.memory_space<smem>>
    %445 = vector.broadcast %444 : f32 to vector<2x8x8xf32>
    %446 = arith.mulf %445, %439 : vector<2x8x8xf32>
    %447 = arith.addf %429, %446 : vector<2x8x8xf32>
    %c78 = arith.constant 78 : index
    %448 = memref.load %arg1[%c78] : memref<108xf32, #tpu.memory_space<smem>>
    %449 = vector.broadcast %448 : f32 to vector<2x8x8xf32>
    %450 = arith.mulf %449, %439 : vector<2x8x8xf32>
    %451 = arith.addf %433, %450 : vector<2x8x8xf32>
    %c105 = arith.constant 105 : index
    %452 = memref.load %arg1[%c105] : memref<108xf32, #tpu.memory_space<smem>>
    %453 = vector.broadcast %452 : f32 to vector<2x8x8xf32>
    %454 = arith.mulf %453, %439 : vector<2x8x8xf32>
    %455 = arith.addf %437, %454 : vector<2x8x8xf32>
    %c0_107 = arith.constant 0 : index
    %c9_108 = arith.constant 9 : index
    %c1_109 = arith.constant 1 : index
    %c0_110 = arith.constant 0 : index
    %456 = vector.load %arg0[%c0_107, %c9_108, %c1_109, %c0_110] : memref<2x12x9x9xf32, #tpu.memory_space<vmem>>, vector<2x1x8x8xf32>
    %457 = vector.shape_cast %456 : vector<2x1x8x8xf32> to vector<2x8x8xf32>
    %c25 = arith.constant 25 : index
    %458 = memref.load %arg1[%c25] : memref<108xf32, #tpu.memory_space<smem>>
    %459 = vector.broadcast %458 : f32 to vector<2x8x8xf32>
    %460 = arith.mulf %459, %457 : vector<2x8x8xf32>
    %461 = arith.addf %443, %460 : vector<2x8x8xf32>
    %c52 = arith.constant 52 : index
    %462 = memref.load %arg1[%c52] : memref<108xf32, #tpu.memory_space<smem>>
    %463 = vector.broadcast %462 : f32 to vector<2x8x8xf32>
    %464 = arith.mulf %463, %457 : vector<2x8x8xf32>
    %465 = arith.addf %447, %464 : vector<2x8x8xf32>
    %c79 = arith.constant 79 : index
    %466 = memref.load %arg1[%c79] : memref<108xf32, #tpu.memory_space<smem>>
    %467 = vector.broadcast %466 : f32 to vector<2x8x8xf32>
    %468 = arith.mulf %467, %457 : vector<2x8x8xf32>
    %469 = arith.addf %451, %468 : vector<2x8x8xf32>
    %c106 = arith.constant 106 : index
    %470 = memref.load %arg1[%c106] : memref<108xf32, #tpu.memory_space<smem>>
    %471 = vector.broadcast %470 : f32 to vector<2x8x8xf32>
    %472 = arith.mulf %471, %457 : vector<2x8x8xf32>
    %473 = arith.addf %455, %472 : vector<2x8x8xf32>
    %c0_111 = arith.constant 0 : index
    %c8_112 = arith.constant 8 : index
    %c1_113 = arith.constant 1 : index
    %c1_114 = arith.constant 1 : index
    %474 = vector.load %arg0[%c0_111, %c8_112, %c1_113, %c1_114] : memref<2x12x9x9xf32, #tpu.memory_space<vmem>>, vector<2x1x8x8xf32>
    %475 = vector.shape_cast %474 : vector<2x1x8x8xf32> to vector<2x8x8xf32>
    %c26 = arith.constant 26 : index
    %476 = memref.load %arg1[%c26] : memref<108xf32, #tpu.memory_space<smem>>
    %477 = vector.broadcast %476 : f32 to vector<2x8x8xf32>
    %478 = arith.mulf %477, %475 : vector<2x8x8xf32>
    %479 = arith.addf %461, %478 : vector<2x8x8xf32>
    %c53 = arith.constant 53 : index
    %480 = memref.load %arg1[%c53] : memref<108xf32, #tpu.memory_space<smem>>
    %481 = vector.broadcast %480 : f32 to vector<2x8x8xf32>
    %482 = arith.mulf %481, %475 : vector<2x8x8xf32>
    %483 = arith.addf %465, %482 : vector<2x8x8xf32>
    %c80 = arith.constant 80 : index
    %484 = memref.load %arg1[%c80] : memref<108xf32, #tpu.memory_space<smem>>
    %485 = vector.broadcast %484 : f32 to vector<2x8x8xf32>
    %486 = arith.mulf %485, %475 : vector<2x8x8xf32>
    %487 = arith.addf %469, %486 : vector<2x8x8xf32>
    %c107 = arith.constant 107 : index
    %488 = memref.load %arg1[%c107] : memref<108xf32, #tpu.memory_space<smem>>
    %489 = vector.broadcast %488 : f32 to vector<2x8x8xf32>
    %490 = arith.mulf %489, %475 : vector<2x8x8xf32>
    %491 = arith.addf %473, %490 : vector<2x8x8xf32>
    %c0_115 = arith.constant 0 : index
    %492 = memref.load %arg2[%c0_115] : memref<4xf32, #tpu.memory_space<smem>>
    %493 = vector.broadcast %492 : f32 to vector<2x8x8xf32>
    %494 = arith.addf %479, %493 : vector<2x8x8xf32>
    %cst_116 = arith.constant 0.000000e+00 : f32
    %495 = vector.broadcast %cst_116 : f32 to vector<2x8x8xf32>
    %496 = arith.maximumf %494, %495 : vector<2x8x8xf32>
    %497 = vector.extract_strided_slice %496 {offsets = [0, 0, 0], sizes = [1, 8, 8], strides = [1, 1, 1]} : vector<2x8x8xf32> to vector<1x8x8xf32>
    %498 = vector.shape_cast %497 : vector<1x8x8xf32> to vector<8x8xf32>
    %c0_117 = arith.constant 0 : index
    %c1_118 = arith.constant 1 : index
    %c1_119 = arith.constant 1 : index
    %499 = vector.load %arg6[%c0_117, %c1_118, %c1_119] : memref<8x10x10xf32, #tpu.memory_space<vmem>>, vector<1x8x8xf32>
    %500 = vector.shape_cast %499 : vector<1x8x8xf32> to vector<8x8xf32>
    %501 = vector.shape_cast %498 : vector<8x8xf32> to vector<1x8x8xf32>
    tpu.vector_store %arg6[%c0_117, %c1_118, %c1_119], %501 {strides = array<i32>} : memref<8x10x10xf32, #tpu.memory_space<vmem>>, vector<1x8x8xf32>,
    %502 = vector.extract_strided_slice %496 {offsets = [1, 0, 0], sizes = [1, 8, 8], strides = [1, 1, 1]} : vector<2x8x8xf32> to vector<1x8x8xf32>
    %503 = vector.shape_cast %502 : vector<1x8x8xf32> to vector<8x8xf32>
    %c4_120 = arith.constant 4 : index
    %c1_121 = arith.constant 1 : index
    %c1_122 = arith.constant 1 : index
    %504 = vector.load %arg6[%c4_120, %c1_121, %c1_122] : memref<8x10x10xf32, #tpu.memory_space<vmem>>, vector<1x8x8xf32>
    %505 = vector.shape_cast %504 : vector<1x8x8xf32> to vector<8x8xf32>
    %506 = vector.shape_cast %503 : vector<8x8xf32> to vector<1x8x8xf32>
    tpu.vector_store %arg6[%c4_120, %c1_121, %c1_122], %506 {strides = array<i32>} : memref<8x10x10xf32, #tpu.memory_space<vmem>>, vector<1x8x8xf32>,
    %c1_123 = arith.constant 1 : index
    %507 = memref.load %arg2[%c1_123] : memref<4xf32, #tpu.memory_space<smem>>
    %508 = vector.broadcast %507 : f32 to vector<2x8x8xf32>
    %509 = arith.addf %483, %508 : vector<2x8x8xf32>
    %cst_124 = arith.constant 0.000000e+00 : f32
    %510 = vector.broadcast %cst_124 : f32 to vector<2x8x8xf32>
    %511 = arith.maximumf %509, %510 : vector<2x8x8xf32>
    %512 = vector.extract_strided_slice %511 {offsets = [0, 0, 0], sizes = [1, 8, 8], strides = [1, 1, 1]} : vector<2x8x8xf32> to vector<1x8x8xf32>
    %513 = vector.shape_cast %512 : vector<1x8x8xf32> to vector<8x8xf32>
    %c1_125 = arith.constant 1 : index
    %c1_126 = arith.constant 1 : index
    %c1_127 = arith.constant 1 : index
    %514 = vector.load %arg6[%c1_125, %c1_126, %c1_127] : memref<8x10x10xf32, #tpu.memory_space<vmem>>, vector<1x8x8xf32>
    %515 = vector.shape_cast %514 : vector<1x8x8xf32> to vector<8x8xf32>
    %516 = vector.shape_cast %513 : vector<8x8xf32> to vector<1x8x8xf32>
    tpu.vector_store %arg6[%c1_125, %c1_126, %c1_127], %516 {strides = array<i32>} : memref<8x10x10xf32, #tpu.memory_space<vmem>>, vector<1x8x8xf32>,
    %517 = vector.extract_strided_slice %511 {offsets = [1, 0, 0], sizes = [1, 8, 8], strides = [1, 1, 1]} : vector<2x8x8xf32> to vector<1x8x8xf32>
    %518 = vector.shape_cast %517 : vector<1x8x8xf32> to vector<8x8xf32>
    %c5_128 = arith.constant 5 : index
    %c1_129 = arith.constant 1 : index
    %c1_130 = arith.constant 1 : index
    %519 = vector.load %arg6[%c5_128, %c1_129, %c1_130] : memref<8x10x10xf32, #tpu.memory_space<vmem>>, vector<1x8x8xf32>
    %520 = vector.shape_cast %519 : vector<1x8x8xf32> to vector<8x8xf32>
    %521 = vector.shape_cast %518 : vector<8x8xf32> to vector<1x8x8xf32>
    tpu.vector_store %arg6[%c5_128, %c1_129, %c1_130], %521 {strides = array<i32>} : memref<8x10x10xf32, #tpu.memory_space<vmem>>, vector<1x8x8xf32>,
    %c2_131 = arith.constant 2 : index
    %522 = memref.load %arg2[%c2_131] : memref<4xf32, #tpu.memory_space<smem>>
    %523 = vector.broadcast %522 : f32 to vector<2x8x8xf32>
    %524 = arith.addf %487, %523 : vector<2x8x8xf32>
    %cst_132 = arith.constant 0.000000e+00 : f32
    %525 = vector.broadcast %cst_132 : f32 to vector<2x8x8xf32>
    %526 = arith.maximumf %524, %525 : vector<2x8x8xf32>
    %527 = vector.extract_strided_slice %526 {offsets = [0, 0, 0], sizes = [1, 8, 8], strides = [1, 1, 1]} : vector<2x8x8xf32> to vector<1x8x8xf32>
    %528 = vector.shape_cast %527 : vector<1x8x8xf32> to vector<8x8xf32>
    %c2_133 = arith.constant 2 : index
    %c1_134 = arith.constant 1 : index
    %c1_135 = arith.constant 1 : index
    %529 = vector.load %arg6[%c2_133, %c1_134, %c1_135] : memref<8x10x10xf32, #tpu.memory_space<vmem>>, vector<1x8x8xf32>
    %530 = vector.shape_cast %529 : vector<1x8x8xf32> to vector<8x8xf32>
    %531 = vector.shape_cast %528 : vector<8x8xf32> to vector<1x8x8xf32>
    tpu.vector_store %arg6[%c2_133, %c1_134, %c1_135], %531 {strides = array<i32>} : memref<8x10x10xf32, #tpu.memory_space<vmem>>, vector<1x8x8xf32>,
    %532 = vector.extract_strided_slice %526 {offsets = [1, 0, 0], sizes = [1, 8, 8], strides = [1, 1, 1]} : vector<2x8x8xf32> to vector<1x8x8xf32>
    %533 = vector.shape_cast %532 : vector<1x8x8xf32> to vector<8x8xf32>
    %c6_136 = arith.constant 6 : index
    %c1_137 = arith.constant 1 : index
    %c1_138 = arith.constant 1 : index
    %534 = vector.load %arg6[%c6_136, %c1_137, %c1_138] : memref<8x10x10xf32, #tpu.memory_space<vmem>>, vector<1x8x8xf32>
    %535 = vector.shape_cast %534 : vector<1x8x8xf32> to vector<8x8xf32>
    %536 = vector.shape_cast %533 : vector<8x8xf32> to vector<1x8x8xf32>
    tpu.vector_store %arg6[%c6_136, %c1_137, %c1_138], %536 {strides = array<i32>} : memref<8x10x10xf32, #tpu.memory_space<vmem>>, vector<1x8x8xf32>,
    %c3_139 = arith.constant 3 : index
    %537 = memref.load %arg2[%c3_139] : memref<4xf32, #tpu.memory_space<smem>>
    %538 = vector.broadcast %537 : f32 to vector<2x8x8xf32>
    %539 = arith.addf %491, %538 : vector<2x8x8xf32>
    %cst_140 = arith.constant 0.000000e+00 : f32
    %540 = vector.broadcast %cst_140 : f32 to vector<2x8x8xf32>
    %541 = arith.maximumf %539, %540 : vector<2x8x8xf32>
    %542 = vector.extract_strided_slice %541 {offsets = [0, 0, 0], sizes = [1, 8, 8], strides = [1, 1, 1]} : vector<2x8x8xf32> to vector<1x8x8xf32>
    %543 = vector.shape_cast %542 : vector<1x8x8xf32> to vector<8x8xf32>
    %c3_141 = arith.constant 3 : index
    %c1_142 = arith.constant 1 : index
    %c1_143 = arith.constant 1 : index
    %544 = vector.load %arg6[%c3_141, %c1_142, %c1_143] : memref<8x10x10xf32, #tpu.memory_space<vmem>>, vector<1x8x8xf32>
    %545 = vector.shape_cast %544 : vector<1x8x8xf32> to vector<8x8xf32>
    %546 = vector.shape_cast %543 : vector<8x8xf32> to vector<1x8x8xf32>
    tpu.vector_store %arg6[%c3_141, %c1_142, %c1_143], %546 {strides = array<i32>} : memref<8x10x10xf32, #tpu.memory_space<vmem>>, vector<1x8x8xf32>,
    %547 = vector.extract_strided_slice %541 {offsets = [1, 0, 0], sizes = [1, 8, 8], strides = [1, 1, 1]} : vector<2x8x8xf32> to vector<1x8x8xf32>
    %548 = vector.shape_cast %547 : vector<1x8x8xf32> to vector<8x8xf32>
    %c7_144 = arith.constant 7 : index
    %c1_145 = arith.constant 1 : index
    %c1_146 = arith.constant 1 : index
    %549 = vector.load %arg6[%c7_144, %c1_145, %c1_146] : memref<8x10x10xf32, #tpu.memory_space<vmem>>, vector<1x8x8xf32>
    %550 = vector.shape_cast %549 : vector<1x8x8xf32> to vector<8x8xf32>
    %551 = vector.shape_cast %548 : vector<8x8xf32> to vector<1x8x8xf32>
    tpu.vector_store %arg6[%c7_144, %c1_145, %c1_146], %551 {strides = array<i32>} : memref<8x10x10xf32, #tpu.memory_space<vmem>>, vector<1x8x8xf32>,
    %c0_147 = arith.constant 0 : index
    %c0_148 = arith.constant 0 : index
    %c0_149 = arith.constant 0 : index
    %c0_150 = arith.constant 0 : index
    %552 = vector.load %arg3[%c0_147, %c0_148, %c0_149, %c0_150] : memref<4x8x5x5xf32, #tpu.memory_space<vmem>>, vector<4x8x5x5xf32>
    %553 = vector.extract_strided_slice %552 {offsets = [0, 0, 0, 0], sizes = [4, 1, 5, 5], strides = [1, 1, 1, 1]} : vector<4x8x5x5xf32> to vector<4x1x5x5xf32>
    %554 = vector.shape_cast %553 : vector<4x1x5x5xf32> to vector<4x5x5xf32>
    %555 = vector.extract_strided_slice %552 {offsets = [0, 1, 0, 0], sizes = [4, 1, 5, 5], strides = [1, 1, 1, 1]} : vector<4x8x5x5xf32> to vector<4x1x5x5xf32>
    %556 = vector.shape_cast %555 : vector<4x1x5x5xf32> to vector<4x5x5xf32>
    %557 = vector.extract_strided_slice %552 {offsets = [0, 2, 0, 0], sizes = [4, 1, 5, 5], strides = [1, 1, 1, 1]} : vector<4x8x5x5xf32> to vector<4x1x5x5xf32>
    %558 = vector.shape_cast %557 : vector<4x1x5x5xf32> to vector<4x5x5xf32>
    %559 = vector.extract_strided_slice %552 {offsets = [0, 3, 0, 0], sizes = [4, 1, 5, 5], strides = [1, 1, 1, 1]} : vector<4x8x5x5xf32> to vector<4x1x5x5xf32>
    %560 = vector.shape_cast %559 : vector<4x1x5x5xf32> to vector<4x5x5xf32>
    %561 = vector.extract_strided_slice %552 {offsets = [0, 4, 0, 0], sizes = [4, 1, 5, 5], strides = [1, 1, 1, 1]} : vector<4x8x5x5xf32> to vector<4x1x5x5xf32>
    %562 = vector.shape_cast %561 : vector<4x1x5x5xf32> to vector<4x5x5xf32>
    %563 = vector.extract_strided_slice %552 {offsets = [0, 5, 0, 0], sizes = [4, 1, 5, 5], strides = [1, 1, 1, 1]} : vector<4x8x5x5xf32> to vector<4x1x5x5xf32>
    %564 = vector.shape_cast %563 : vector<4x1x5x5xf32> to vector<4x5x5xf32>
    %565 = vector.extract_strided_slice %552 {offsets = [0, 6, 0, 0], sizes = [4, 1, 5, 5], strides = [1, 1, 1, 1]} : vector<4x8x5x5xf32> to vector<4x1x5x5xf32>
    %566 = vector.shape_cast %565 : vector<4x1x5x5xf32> to vector<4x5x5xf32>
    %567 = vector.extract_strided_slice %552 {offsets = [0, 7, 0, 0], sizes = [4, 1, 5, 5], strides = [1, 1, 1, 1]} : vector<4x8x5x5xf32> to vector<4x1x5x5xf32>
    %568 = vector.shape_cast %567 : vector<4x1x5x5xf32> to vector<4x5x5xf32>
    %c0_151 = arith.constant 0 : index
    %c0_152 = arith.constant 0 : index
    %569 = vector.load %arg4[%c0_151, %c0_152] : memref<1x4xf32, #tpu.memory_space<vmem>>, vector<1x4xf32>
    %570 = vector.shape_cast %569 : vector<1x4xf32> to vector<4xf32>
    %c0_153 = arith.constant 0 : index
    %c0_154 = arith.constant 0 : index
    %c0_155 = arith.constant 0 : index
    %571 = vector.load %arg6[%c0_153, %c0_154, %c0_155] : memref<8x10x10xf32, #tpu.memory_space<vmem>>, vector<8x5x5xf32>
    %cst_156 = arith.constant 0.000000e+00 : f32
    %572 = vector.broadcast %cst_156 : f32 to vector<4x5x5xf32>
    %573 = vector.extract_strided_slice %571 {offsets = [0, 0, 0], sizes = [1, 5, 5], strides = [1, 1, 1]} : vector<8x5x5xf32> to vector<1x5x5xf32>
    %574 = vector.shape_cast %573 : vector<1x5x5xf32> to vector<5x5xf32>
    %575 = vector.shape_cast %574 : vector<5x5xf32> to vector<1x5x5xf32>
    %576 = vector.broadcast %575 : vector<1x5x5xf32> to vector<4x5x5xf32>
    %577 = arith.mulf %554, %576 : vector<4x5x5xf32>
    %578 = arith.addf %572, %577 : vector<4x5x5xf32>
    %579 = vector.extract_strided_slice %571 {offsets = [1, 0, 0], sizes = [1, 5, 5], strides = [1, 1, 1]} : vector<8x5x5xf32> to vector<1x5x5xf32>
    %580 = vector.shape_cast %579 : vector<1x5x5xf32> to vector<5x5xf32>
    %581 = vector.shape_cast %580 : vector<5x5xf32> to vector<1x5x5xf32>
    %582 = vector.broadcast %581 : vector<1x5x5xf32> to vector<4x5x5xf32>
    %583 = arith.mulf %556, %582 : vector<4x5x5xf32>
    %584 = arith.addf %578, %583 : vector<4x5x5xf32>
    %585 = vector.extract_strided_slice %571 {offsets = [2, 0, 0], sizes = [1, 5, 5], strides = [1, 1, 1]} : vector<8x5x5xf32> to vector<1x5x5xf32>
    %586 = vector.shape_cast %585 : vector<1x5x5xf32> to vector<5x5xf32>
    %587 = vector.shape_cast %586 : vector<5x5xf32> to vector<1x5x5xf32>
    %588 = vector.broadcast %587 : vector<1x5x5xf32> to vector<4x5x5xf32>
    %589 = arith.mulf %558, %588 : vector<4x5x5xf32>
    %590 = arith.addf %584, %589 : vector<4x5x5xf32>
    %591 = vector.extract_strided_slice %571 {offsets = [3, 0, 0], sizes = [1, 5, 5], strides = [1, 1, 1]} : vector<8x5x5xf32> to vector<1x5x5xf32>
    %592 = vector.shape_cast %591 : vector<1x5x5xf32> to vector<5x5xf32>
    %593 = vector.shape_cast %592 : vector<5x5xf32> to vector<1x5x5xf32>
    %594 = vector.broadcast %593 : vector<1x5x5xf32> to vector<4x5x5xf32>
    %595 = arith.mulf %560, %594 : vector<4x5x5xf32>
    %596 = arith.addf %590, %595 : vector<4x5x5xf32>
    %597 = vector.extract_strided_slice %571 {offsets = [4, 0, 0], sizes = [1, 5, 5], strides = [1, 1, 1]} : vector<8x5x5xf32> to vector<1x5x5xf32>
    %598 = vector.shape_cast %597 : vector<1x5x5xf32> to vector<5x5xf32>
    %599 = vector.shape_cast %598 : vector<5x5xf32> to vector<1x5x5xf32>
    %600 = vector.broadcast %599 : vector<1x5x5xf32> to vector<4x5x5xf32>
    %601 = arith.mulf %562, %600 : vector<4x5x5xf32>
    %602 = arith.addf %596, %601 : vector<4x5x5xf32>
    %603 = vector.extract_strided_slice %571 {offsets = [5, 0, 0], sizes = [1, 5, 5], strides = [1, 1, 1]} : vector<8x5x5xf32> to vector<1x5x5xf32>
    %604 = vector.shape_cast %603 : vector<1x5x5xf32> to vector<5x5xf32>
    %605 = vector.shape_cast %604 : vector<5x5xf32> to vector<1x5x5xf32>
    %606 = vector.broadcast %605 : vector<1x5x5xf32> to vector<4x5x5xf32>
    %607 = arith.mulf %564, %606 : vector<4x5x5xf32>
    %608 = arith.addf %602, %607 : vector<4x5x5xf32>
    %609 = vector.extract_strided_slice %571 {offsets = [6, 0, 0], sizes = [1, 5, 5], strides = [1, 1, 1]} : vector<8x5x5xf32> to vector<1x5x5xf32>
    %610 = vector.shape_cast %609 : vector<1x5x5xf32> to vector<5x5xf32>
    %611 = vector.shape_cast %610 : vector<5x5xf32> to vector<1x5x5xf32>
    %612 = vector.broadcast %611 : vector<1x5x5xf32> to vector<4x5x5xf32>
    %613 = arith.mulf %566, %612 : vector<4x5x5xf32>
    %614 = arith.addf %608, %613 : vector<4x5x5xf32>
    %615 = vector.extract_strided_slice %571 {offsets = [7, 0, 0], sizes = [1, 5, 5], strides = [1, 1, 1]} : vector<8x5x5xf32> to vector<1x5x5xf32>
    %616 = vector.shape_cast %615 : vector<1x5x5xf32> to vector<5x5xf32>
    %617 = vector.shape_cast %616 : vector<5x5xf32> to vector<1x5x5xf32>
    %618 = vector.broadcast %617 : vector<1x5x5xf32> to vector<4x5x5xf32>
    %619 = arith.mulf %568, %618 : vector<4x5x5xf32>
    %620 = arith.addf %614, %619 : vector<4x5x5xf32>
    %cst_157 = arith.constant dense<0.000000e+00> : vector<4x5xf32>
    %621 = vector.multi_reduction <add>, %620, %cst_157 [2] : vector<4x5x5xf32> to vector<4x5xf32>
    %cst_158 = arith.constant dense<0.000000e+00> : vector<4xf32>
    %622 = vector.multi_reduction <add>, %621, %cst_158 [1] : vector<4x5xf32> to vector<4xf32>
    %623 = arith.addf %622, %570 : vector<4xf32>
    %cst_159 = arith.constant 0.000000e+00 : f32
    %624 = vector.broadcast %cst_159 : f32 to vector<4xf32>
    %625 = arith.maximumf %623, %624 : vector<4xf32>
    %c0_160 = arith.constant 0 : index
    %c0_161 = arith.constant 0 : index
    %626 = vector.load %arg5[%c0_160, %c0_161] : memref<4x4xf32, #tpu.memory_space<vmem>>, vector<1x4xf32>
    %627 = vector.shape_cast %626 : vector<1x4xf32> to vector<4xf32>
    %628 = vector.shape_cast %625 : vector<4xf32> to vector<1x4xf32>
    tpu.vector_store %arg5[%c0_160, %c0_161], %628 {strides = array<i32>} : memref<4x4xf32, #tpu.memory_space<vmem>>, vector<1x4xf32>,
    %c0_162 = arith.constant 0 : index
    %c0_163 = arith.constant 0 : index
    %c4_164 = arith.constant 4 : index
    %629 = vector.load %arg6[%c0_162, %c0_163, %c4_164] : memref<8x10x10xf32, #tpu.memory_space<vmem>>, vector<8x5x5xf32>
    %cst_165 = arith.constant 0.000000e+00 : f32
    %630 = vector.broadcast %cst_165 : f32 to vector<4x5x5xf32>
    %631 = vector.extract_strided_slice %629 {offsets = [0, 0, 0], sizes = [1, 5, 5], strides = [1, 1, 1]} : vector<8x5x5xf32> to vector<1x5x5xf32>
    %632 = vector.shape_cast %631 : vector<1x5x5xf32> to vector<5x5xf32>
    %633 = vector.shape_cast %632 : vector<5x5xf32> to vector<1x5x5xf32>
    %634 = vector.broadcast %633 : vector<1x5x5xf32> to vector<4x5x5xf32>
    %635 = arith.mulf %554, %634 : vector<4x5x5xf32>
    %636 = arith.addf %630, %635 : vector<4x5x5xf32>
    %637 = vector.extract_strided_slice %629 {offsets = [1, 0, 0], sizes = [1, 5, 5], strides = [1, 1, 1]} : vector<8x5x5xf32> to vector<1x5x5xf32>
    %638 = vector.shape_cast %637 : vector<1x5x5xf32> to vector<5x5xf32>
    %639 = vector.shape_cast %638 : vector<5x5xf32> to vector<1x5x5xf32>
    %640 = vector.broadcast %639 : vector<1x5x5xf32> to vector<4x5x5xf32>
    %641 = arith.mulf %556, %640 : vector<4x5x5xf32>
    %642 = arith.addf %636, %641 : vector<4x5x5xf32>
    %643 = vector.extract_strided_slice %629 {offsets = [2, 0, 0], sizes = [1, 5, 5], strides = [1, 1, 1]} : vector<8x5x5xf32> to vector<1x5x5xf32>
    %644 = vector.shape_cast %643 : vector<1x5x5xf32> to vector<5x5xf32>
    %645 = vector.shape_cast %644 : vector<5x5xf32> to vector<1x5x5xf32>
    %646 = vector.broadcast %645 : vector<1x5x5xf32> to vector<4x5x5xf32>
    %647 = arith.mulf %558, %646 : vector<4x5x5xf32>
    %648 = arith.addf %642, %647 : vector<4x5x5xf32>
    %649 = vector.extract_strided_slice %629 {offsets = [3, 0, 0], sizes = [1, 5, 5], strides = [1, 1, 1]} : vector<8x5x5xf32> to vector<1x5x5xf32>
    %650 = vector.shape_cast %649 : vector<1x5x5xf32> to vector<5x5xf32>
    %651 = vector.shape_cast %650 : vector<5x5xf32> to vector<1x5x5xf32>
    %652 = vector.broadcast %651 : vector<1x5x5xf32> to vector<4x5x5xf32>
    %653 = arith.mulf %560, %652 : vector<4x5x5xf32>
    %654 = arith.addf %648, %653 : vector<4x5x5xf32>
    %655 = vector.extract_strided_slice %629 {offsets = [4, 0, 0], sizes = [1, 5, 5], strides = [1, 1, 1]} : vector<8x5x5xf32> to vector<1x5x5xf32>
    %656 = vector.shape_cast %655 : vector<1x5x5xf32> to vector<5x5xf32>
    %657 = vector.shape_cast %656 : vector<5x5xf32> to vector<1x5x5xf32>
    %658 = vector.broadcast %657 : vector<1x5x5xf32> to vector<4x5x5xf32>
    %659 = arith.mulf %562, %658 : vector<4x5x5xf32>
    %660 = arith.addf %654, %659 : vector<4x5x5xf32>
    %661 = vector.extract_strided_slice %629 {offsets = [5, 0, 0], sizes = [1, 5, 5], strides = [1, 1, 1]} : vector<8x5x5xf32> to vector<1x5x5xf32>
    %662 = vector.shape_cast %661 : vector<1x5x5xf32> to vector<5x5xf32>
    %663 = vector.shape_cast %662 : vector<5x5xf32> to vector<1x5x5xf32>
    %664 = vector.broadcast %663 : vector<1x5x5xf32> to vector<4x5x5xf32>
    %665 = arith.mulf %564, %664 : vector<4x5x5xf32>
    %666 = arith.addf %660, %665 : vector<4x5x5xf32>
    %667 = vector.extract_strided_slice %629 {offsets = [6, 0, 0], sizes = [1, 5, 5], strides = [1, 1, 1]} : vector<8x5x5xf32> to vector<1x5x5xf32>
    %668 = vector.shape_cast %667 : vector<1x5x5xf32> to vector<5x5xf32>
    %669 = vector.shape_cast %668 : vector<5x5xf32> to vector<1x5x5xf32>
    %670 = vector.broadcast %669 : vector<1x5x5xf32> to vector<4x5x5xf32>
    %671 = arith.mulf %566, %670 : vector<4x5x5xf32>
    %672 = arith.addf %666, %671 : vector<4x5x5xf32>
    %673 = vector.extract_strided_slice %629 {offsets = [7, 0, 0], sizes = [1, 5, 5], strides = [1, 1, 1]} : vector<8x5x5xf32> to vector<1x5x5xf32>
    %674 = vector.shape_cast %673 : vector<1x5x5xf32> to vector<5x5xf32>
    %675 = vector.shape_cast %674 : vector<5x5xf32> to vector<1x5x5xf32>
    %676 = vector.broadcast %675 : vector<1x5x5xf32> to vector<4x5x5xf32>
    %677 = arith.mulf %568, %676 : vector<4x5x5xf32>
    %678 = arith.addf %672, %677 : vector<4x5x5xf32>
    %cst_166 = arith.constant dense<0.000000e+00> : vector<4x5xf32>
    %679 = vector.multi_reduction <add>, %678, %cst_166 [2] : vector<4x5x5xf32> to vector<4x5xf32>
    %cst_167 = arith.constant dense<0.000000e+00> : vector<4xf32>
    %680 = vector.multi_reduction <add>, %679, %cst_167 [1] : vector<4x5xf32> to vector<4xf32>
    %681 = arith.addf %680, %570 : vector<4xf32>
    %cst_168 = arith.constant 0.000000e+00 : f32
    %682 = vector.broadcast %cst_168 : f32 to vector<4xf32>
    %683 = arith.maximumf %681, %682 : vector<4xf32>
    %c1_169 = arith.constant 1 : index
    %c0_170 = arith.constant 0 : index
    %684 = vector.load %arg5[%c1_169, %c0_170] : memref<4x4xf32, #tpu.memory_space<vmem>>, vector<1x4xf32>
    %685 = vector.shape_cast %684 : vector<1x4xf32> to vector<4xf32>
    %686 = vector.shape_cast %683 : vector<4xf32> to vector<1x4xf32>
    tpu.vector_store %arg5[%c1_169, %c0_170], %686 {strides = array<i32>} : memref<4x4xf32, #tpu.memory_space<vmem>>, vector<1x4xf32>,
    %c0_171 = arith.constant 0 : index
    %c4_172 = arith.constant 4 : index
    %c0_173 = arith.constant 0 : index
    %687 = vector.load %arg6[%c0_171, %c4_172, %c0_173] : memref<8x10x10xf32, #tpu.memory_space<vmem>>, vector<8x5x5xf32>
    %cst_174 = arith.constant 0.000000e+00 : f32
    %688 = vector.broadcast %cst_174 : f32 to vector<4x5x5xf32>
    %689 = vector.extract_strided_slice %687 {offsets = [0, 0, 0], sizes = [1, 5, 5], strides = [1, 1, 1]} : vector<8x5x5xf32> to vector<1x5x5xf32>
    %690 = vector.shape_cast %689 : vector<1x5x5xf32> to vector<5x5xf32>
    %691 = vector.shape_cast %690 : vector<5x5xf32> to vector<1x5x5xf32>
    %692 = vector.broadcast %691 : vector<1x5x5xf32> to vector<4x5x5xf32>
    %693 = arith.mulf %554, %692 : vector<4x5x5xf32>
    %694 = arith.addf %688, %693 : vector<4x5x5xf32>
    %695 = vector.extract_strided_slice %687 {offsets = [1, 0, 0], sizes = [1, 5, 5], strides = [1, 1, 1]} : vector<8x5x5xf32> to vector<1x5x5xf32>
    %696 = vector.shape_cast %695 : vector<1x5x5xf32> to vector<5x5xf32>
    %697 = vector.shape_cast %696 : vector<5x5xf32> to vector<1x5x5xf32>
    %698 = vector.broadcast %697 : vector<1x5x5xf32> to vector<4x5x5xf32>
    %699 = arith.mulf %556, %698 : vector<4x5x5xf32>
    %700 = arith.addf %694, %699 : vector<4x5x5xf32>
    %701 = vector.extract_strided_slice %687 {offsets = [2, 0, 0], sizes = [1, 5, 5], strides = [1, 1, 1]} : vector<8x5x5xf32> to vector<1x5x5xf32>
    %702 = vector.shape_cast %701 : vector<1x5x5xf32> to vector<5x5xf32>
    %703 = vector.shape_cast %702 : vector<5x5xf32> to vector<1x5x5xf32>
    %704 = vector.broadcast %703 : vector<1x5x5xf32> to vector<4x5x5xf32>
    %705 = arith.mulf %558, %704 : vector<4x5x5xf32>
    %706 = arith.addf %700, %705 : vector<4x5x5xf32>
    %707 = vector.extract_strided_slice %687 {offsets = [3, 0, 0], sizes = [1, 5, 5], strides = [1, 1, 1]} : vector<8x5x5xf32> to vector<1x5x5xf32>
    %708 = vector.shape_cast %707 : vector<1x5x5xf32> to vector<5x5xf32>
    %709 = vector.shape_cast %708 : vector<5x5xf32> to vector<1x5x5xf32>
    %710 = vector.broadcast %709 : vector<1x5x5xf32> to vector<4x5x5xf32>
    %711 = arith.mulf %560, %710 : vector<4x5x5xf32>
    %712 = arith.addf %706, %711 : vector<4x5x5xf32>
    %713 = vector.extract_strided_slice %687 {offsets = [4, 0, 0], sizes = [1, 5, 5], strides = [1, 1, 1]} : vector<8x5x5xf32> to vector<1x5x5xf32>
    %714 = vector.shape_cast %713 : vector<1x5x5xf32> to vector<5x5xf32>
    %715 = vector.shape_cast %714 : vector<5x5xf32> to vector<1x5x5xf32>
    %716 = vector.broadcast %715 : vector<1x5x5xf32> to vector<4x5x5xf32>
    %717 = arith.mulf %562, %716 : vector<4x5x5xf32>
    %718 = arith.addf %712, %717 : vector<4x5x5xf32>
    %719 = vector.extract_strided_slice %687 {offsets = [5, 0, 0], sizes = [1, 5, 5], strides = [1, 1, 1]} : vector<8x5x5xf32> to vector<1x5x5xf32>
    %720 = vector.shape_cast %719 : vector<1x5x5xf32> to vector<5x5xf32>
    %721 = vector.shape_cast %720 : vector<5x5xf32> to vector<1x5x5xf32>
    %722 = vector.broadcast %721 : vector<1x5x5xf32> to vector<4x5x5xf32>
    %723 = arith.mulf %564, %722 : vector<4x5x5xf32>
    %724 = arith.addf %718, %723 : vector<4x5x5xf32>
    %725 = vector.extract_strided_slice %687 {offsets = [6, 0, 0], sizes = [1, 5, 5], strides = [1, 1, 1]} : vector<8x5x5xf32> to vector<1x5x5xf32>
    %726 = vector.shape_cast %725 : vector<1x5x5xf32> to vector<5x5xf32>
    %727 = vector.shape_cast %726 : vector<5x5xf32> to vector<1x5x5xf32>
    %728 = vector.broadcast %727 : vector<1x5x5xf32> to vector<4x5x5xf32>
    %729 = arith.mulf %566, %728 : vector<4x5x5xf32>
    %730 = arith.addf %724, %729 : vector<4x5x5xf32>
    %731 = vector.extract_strided_slice %687 {offsets = [7, 0, 0], sizes = [1, 5, 5], strides = [1, 1, 1]} : vector<8x5x5xf32> to vector<1x5x5xf32>
    %732 = vector.shape_cast %731 : vector<1x5x5xf32> to vector<5x5xf32>
    %733 = vector.shape_cast %732 : vector<5x5xf32> to vector<1x5x5xf32>
    %734 = vector.broadcast %733 : vector<1x5x5xf32> to vector<4x5x5xf32>
    %735 = arith.mulf %568, %734 : vector<4x5x5xf32>
    %736 = arith.addf %730, %735 : vector<4x5x5xf32>
    %cst_175 = arith.constant dense<0.000000e+00> : vector<4x5xf32>
    %737 = vector.multi_reduction <add>, %736, %cst_175 [2] : vector<4x5x5xf32> to vector<4x5xf32>
    %cst_176 = arith.constant dense<0.000000e+00> : vector<4xf32>
    %738 = vector.multi_reduction <add>, %737, %cst_176 [1] : vector<4x5xf32> to vector<4xf32>
    %739 = arith.addf %738, %570 : vector<4xf32>
    %cst_177 = arith.constant 0.000000e+00 : f32
    %740 = vector.broadcast %cst_177 : f32 to vector<4xf32>
    %741 = arith.maximumf %739, %740 : vector<4xf32>
    %c2_178 = arith.constant 2 : index
    %c0_179 = arith.constant 0 : index
    %742 = vector.load %arg5[%c2_178, %c0_179] : memref<4x4xf32, #tpu.memory_space<vmem>>, vector<1x4xf32>
    %743 = vector.shape_cast %742 : vector<1x4xf32> to vector<4xf32>
    %744 = vector.shape_cast %741 : vector<4xf32> to vector<1x4xf32>
    tpu.vector_store %arg5[%c2_178, %c0_179], %744 {strides = array<i32>} : memref<4x4xf32, #tpu.memory_space<vmem>>, vector<1x4xf32>,
    %c0_180 = arith.constant 0 : index
    %c4_181 = arith.constant 4 : index
    %c4_182 = arith.constant 4 : index
    %745 = vector.load %arg6[%c0_180, %c4_181, %c4_182] : memref<8x10x10xf32, #tpu.memory_space<vmem>>, vector<8x5x5xf32>
    %cst_183 = arith.constant 0.000000e+00 : f32
    %746 = vector.broadcast %cst_183 : f32 to vector<4x5x5xf32>
    %747 = vector.extract_strided_slice %745 {offsets = [0, 0, 0], sizes = [1, 5, 5], strides = [1, 1, 1]} : vector<8x5x5xf32> to vector<1x5x5xf32>
    %748 = vector.shape_cast %747 : vector<1x5x5xf32> to vector<5x5xf32>
    %749 = vector.shape_cast %748 : vector<5x5xf32> to vector<1x5x5xf32>
    %750 = vector.broadcast %749 : vector<1x5x5xf32> to vector<4x5x5xf32>
    %751 = arith.mulf %554, %750 : vector<4x5x5xf32>
    %752 = arith.addf %746, %751 : vector<4x5x5xf32>
    %753 = vector.extract_strided_slice %745 {offsets = [1, 0, 0], sizes = [1, 5, 5], strides = [1, 1, 1]} : vector<8x5x5xf32> to vector<1x5x5xf32>
    %754 = vector.shape_cast %753 : vector<1x5x5xf32> to vector<5x5xf32>
    %755 = vector.shape_cast %754 : vector<5x5xf32> to vector<1x5x5xf32>
    %756 = vector.broadcast %755 : vector<1x5x5xf32> to vector<4x5x5xf32>
    %757 = arith.mulf %556, %756 : vector<4x5x5xf32>
    %758 = arith.addf %752, %757 : vector<4x5x5xf32>
    %759 = vector.extract_strided_slice %745 {offsets = [2, 0, 0], sizes = [1, 5, 5], strides = [1, 1, 1]} : vector<8x5x5xf32> to vector<1x5x5xf32>
    %760 = vector.shape_cast %759 : vector<1x5x5xf32> to vector<5x5xf32>
    %761 = vector.shape_cast %760 : vector<5x5xf32> to vector<1x5x5xf32>
    %762 = vector.broadcast %761 : vector<1x5x5xf32> to vector<4x5x5xf32>
    %763 = arith.mulf %558, %762 : vector<4x5x5xf32>
    %764 = arith.addf %758, %763 : vector<4x5x5xf32>
    %765 = vector.extract_strided_slice %745 {offsets = [3, 0, 0], sizes = [1, 5, 5], strides = [1, 1, 1]} : vector<8x5x5xf32> to vector<1x5x5xf32>
    %766 = vector.shape_cast %765 : vector<1x5x5xf32> to vector<5x5xf32>
    %767 = vector.shape_cast %766 : vector<5x5xf32> to vector<1x5x5xf32>
    %768 = vector.broadcast %767 : vector<1x5x5xf32> to vector<4x5x5xf32>
    %769 = arith.mulf %560, %768 : vector<4x5x5xf32>
    %770 = arith.addf %764, %769 : vector<4x5x5xf32>
    %771 = vector.extract_strided_slice %745 {offsets = [4, 0, 0], sizes = [1, 5, 5], strides = [1, 1, 1]} : vector<8x5x5xf32> to vector<1x5x5xf32>
    %772 = vector.shape_cast %771 : vector<1x5x5xf32> to vector<5x5xf32>
    %773 = vector.shape_cast %772 : vector<5x5xf32> to vector<1x5x5xf32>
    %774 = vector.broadcast %773 : vector<1x5x5xf32> to vector<4x5x5xf32>
    %775 = arith.mulf %562, %774 : vector<4x5x5xf32>
    %776 = arith.addf %770, %775 : vector<4x5x5xf32>
    %777 = vector.extract_strided_slice %745 {offsets = [5, 0, 0], sizes = [1, 5, 5], strides = [1, 1, 1]} : vector<8x5x5xf32> to vector<1x5x5xf32>
    %778 = vector.shape_cast %777 : vector<1x5x5xf32> to vector<5x5xf32>
    %779 = vector.shape_cast %778 : vector<5x5xf32> to vector<1x5x5xf32>
    %780 = vector.broadcast %779 : vector<1x5x5xf32> to vector<4x5x5xf32>
    %781 = arith.mulf %564, %780 : vector<4x5x5xf32>
    %782 = arith.addf %776, %781 : vector<4x5x5xf32>
    %783 = vector.extract_strided_slice %745 {offsets = [6, 0, 0], sizes = [1, 5, 5], strides = [1, 1, 1]} : vector<8x5x5xf32> to vector<1x5x5xf32>
    %784 = vector.shape_cast %783 : vector<1x5x5xf32> to vector<5x5xf32>
    %785 = vector.shape_cast %784 : vector<5x5xf32> to vector<1x5x5xf32>
    %786 = vector.broadcast %785 : vector<1x5x5xf32> to vector<4x5x5xf32>
    %787 = arith.mulf %566, %786 : vector<4x5x5xf32>
    %788 = arith.addf %782, %787 : vector<4x5x5xf32>
    %789 = vector.extract_strided_slice %745 {offsets = [7, 0, 0], sizes = [1, 5, 5], strides = [1, 1, 1]} : vector<8x5x5xf32> to vector<1x5x5xf32>
    %790 = vector.shape_cast %789 : vector<1x5x5xf32> to vector<5x5xf32>
    %791 = vector.shape_cast %790 : vector<5x5xf32> to vector<1x5x5xf32>
    %792 = vector.broadcast %791 : vector<1x5x5xf32> to vector<4x5x5xf32>
    %793 = arith.mulf %568, %792 : vector<4x5x5xf32>
    %794 = arith.addf %788, %793 : vector<4x5x5xf32>
    %cst_184 = arith.constant dense<0.000000e+00> : vector<4x5xf32>
    %795 = vector.multi_reduction <add>, %794, %cst_184 [2] : vector<4x5x5xf32> to vector<4x5xf32>
    %cst_185 = arith.constant dense<0.000000e+00> : vector<4xf32>
    %796 = vector.multi_reduction <add>, %795, %cst_185 [1] : vector<4x5xf32> to vector<4xf32>
    %797 = arith.addf %796, %570 : vector<4xf32>
    %cst_186 = arith.constant 0.000000e+00 : f32
    %798 = vector.broadcast %cst_186 : f32 to vector<4xf32>
    %799 = arith.maximumf %797, %798 : vector<4xf32>
    %c3_187 = arith.constant 3 : index
    %c0_188 = arith.constant 0 : index
    %800 = vector.load %arg5[%c3_187, %c0_188] : memref<4x4xf32, #tpu.memory_space<vmem>>, vector<1x4xf32>
    %801 = vector.shape_cast %800 : vector<1x4xf32> to vector<4xf32>
    %802 = vector.shape_cast %799 : vector<4xf32> to vector<1x4xf32>
    tpu.vector_store %arg5[%c3_187, %c0_188], %802 {strides = array<i32>} : memref<4x4xf32, #tpu.memory_space<vmem>>, vector<1x4xf32>,
    return
  }
}

</mosaic_0001>

<llo_original>
// kernel: _model_forward.1
$region0: #{_model_forward.1}
  #allocation0 [shape = 'u32[]', space=smem, size = 0x4, offset = 0x4, fixed_abs, tag = 'smem constant byte address 0x4 - core index']
  #allocation1 [shape = 'u32[72,128]{1,0:T(1,128)}', space=vmem, size = 0x9000, scoped, tag = 'internal scratch']
  #allocation2 [shape = 'f32[8,10,10]{2,1,0:T(8,128)}', space=vmem, size = 0x10000, scoped, tag = 'scratch operand']
  %s0 = inlined_call_operand.vmem [shape: f32[2,12,9,9], index: 0, kind: input, shape index: {}]
  %s1 = inlined_call_operand.vmem [shape: f32[108], index: 1, kind: input, shape index: {}]
  %s2 = inlined_call_operand.vmem [shape: f32[4], index: 2, kind: input, shape index: {}]
  %s3 = inlined_call_operand.vmem [shape: f32[4,8,5,5], index: 3, kind: input, shape index: {}]
  %s4 = inlined_call_operand.vmem [shape: f32[1,4], index: 4, kind: input, shape index: {}]
  %s5 = inlined_call_operand.hbm [shape: f32[4,4], index: 5, kind: output, shape index: {}]
  %s6 = sld [smem:[#allocation0]]
  $region38: #{_model_forward.1} parent=0
    _
  %s8 = ssub.s32 1, %s6
  %s9 = scalar_select 0, %s8, %s6
  $region1: #{_model_forward.1} parent=0
    #allocation3 [shape = 'u8[512]{0}', space=smem, size = 0x200, scoped, tag = 'input window, operand 1, single buffered']
    #allocation4 [shape = 's32[1]{0}', space=sflag, size = 0x4, scoped, tag = 'scoped memory for _model_forward.1']
    #allocation5 [shape = 's32[1]{0}', space=sflag, size = 0x4, scoped, tag = 'scoped memory for _model_forward.1']
    #allocation6 [shape = 'u8[512]{0}', space=smem, size = 0x200, scoped, tag = 'input window, operand 2, single buffered']
    #allocation7 [shape = 's32[1]{0}', space=sflag, size = 0x4, scoped, tag = 'scoped memory for _model_forward.1']
    #allocation8 [shape = 'u8[2048]{0}', space=vmem, size = 0x800, scoped, tag = 'output window, operand 0, single buffered']
    %10 = vsyncpa [#allocation5], 0
    %11 = vsyncpa [#allocation7], 0
    %12 = vsyncpa [#allocation4], 0
    // Predicated region
    $region2: #{_model_forward.1} parent=1 // pred_check
      _
    $region3: #{_model_forward.1} parent=1 // pred_check_branch
      %14 = sbr.rel (0) target = $region5
    $region4: #{_model_forward.1} parent=1 // pred_region
      _
    $region5: #{_model_forward.1} parent=1 // pred_fallthru
      _
    // Predicated region
    $region6: #{_model_forward.1} parent=1 // pred_check
      _
    $region7: #{_model_forward.1} parent=1 // pred_check_branch
      %16 = sbr.rel (0) target = $region9
    $region8: #{_model_forward.1} parent=1 // pred_region
      %18 = vsyncadd [#allocation5], 0
      %s20 = sshll.u32 %s1, 4
      %s21 = int_to_ptr.vmem [resolvable:$true] %s20
      %23 = dma.vmem_to_smem %s21, 16, [#allocation3], [#allocation5]
    $region9: #{_model_forward.1} parent=1 // pred_fallthru
      _
    // Predicated region
    $region10: #{_model_forward.1} parent=1 // pred_check
      _
    $region11: #{_model_forward.1} parent=1 // pred_check_branch
      %25 = sbr.rel (0) target = $region13
    $region12: #{_model_forward.1} parent=1 // pred_region
      %27 = vsyncadd [#allocation7], 0
      %s29 = sshll.u32 %s2, 4
      %s30 = int_to_ptr.vmem [resolvable:$true] %s29
      %32 = dma.vmem_to_smem %s30, 16, [#allocation6], [#allocation7]
    $region13: #{_model_forward.1} parent=1 // pred_fallthru
      _
    // Predicated region
    $region14: #{_model_forward.1} parent=1 // pred_check
      _
    $region15: #{_model_forward.1} parent=1 // pred_check_branch
      %34 = sbr.rel (0) target = $region17
    $region16: #{_model_forward.1} parent=1 // pred_region
      _
    $region17: #{_model_forward.1} parent=1 // pred_fallthru
      _
    // Predicated region
    $region18: #{_model_forward.1} parent=1 // pred_check
      _
    $region19: #{_model_forward.1} parent=1 // pred_check_branch
      %36 = sbr.rel (0) target = $region21
    $region20: #{_model_forward.1} parent=1 // pred_region
      _
    $region21: #{_model_forward.1} parent=1 // pred_fallthru
      _
    // Predicated region
    $region22: #{_model_forward.1} parent=1 // pred_check
      _
    $region23: #{_model_forward.1} parent=1 // pred_check_branch
      %38 = sbr.rel (0) target = $region25
    $region24: #{_model_forward.1} parent=1 // pred_region
      %40 = dma.done [#allocation5], 16
    $region25: #{_model_forward.1} parent=1 // pred_fallthru
      _
    // Predicated region
    $region26: #{_model_forward.1} parent=1 // pred_check
      _
    $region27: #{_model_forward.1} parent=1 // pred_check_branch
      %42 = sbr.rel (0) target = $region29
    $region28: #{_model_forward.1} parent=1 // pred_region
      %44 = dma.done [#allocation7], 16
    $region29: #{_model_forward.1} parent=1 // pred_fallthru
      _
    %45 = sfence
    %vm46 = vcmask 80896
    %47 = vst.msk [vmem:[#allocation2] sm:$0xff] %vm46, 0.0
    %vm48 = vcmask 74752
    %49 = vst.msk [vmem:[#allocation2 + $0x8] sm:$0x3] %vm48, 0.0
    %50 = vst.msk [vmem:[#allocation2 + $0x10] sm:$0xff] %vm46, 0.0
    %51 = vst.msk [vmem:[#allocation2 + $0x18] sm:$0x3] %vm48, 0.0
    %52 = vst.msk [vmem:[#allocation2 + $0x20] sm:$0xff] %vm46, 0.0
    %53 = vst.msk [vmem:[#allocation2 + $0x28] sm:$0x3] %vm48, 0.0
    %54 = vst.msk [vmem:[#allocation2 + $0x30] sm:$0xff] %vm46, 0.0
    %55 = vst.msk [vmem:[#allocation2 + $0x38] sm:$0x3] %vm48, 0.0
    %56 = vst.msk [vmem:[#allocation2 + $0x40] sm:$0xff] %vm46, 0.0
    %57 = vst.msk [vmem:[#allocation2 + $0x48] sm:$0x3] %vm48, 0.0
    %58 = vst.msk [vmem:[#allocation2 + $0x50] sm:$0xff] %vm46, 0.0
    %59 = vst.msk [vmem:[#allocation2 + $0x58] sm:$0x3] %vm48, 0.0
    %60 = vst.msk [vmem:[#allocation2 + $0x60] sm:$0xff] %vm46, 0.0
    %61 = vst.msk [vmem:[#allocation2 + $0x68] sm:$0x3] %vm48, 0.0
    %62 = vst.msk [vmem:[#allocation2 + $0x70] sm:$0xff] %vm46, 0.0
    %63 = vst.msk [vmem:[#allocation2 + $0x78] sm:$0x3] %vm48, 0.0
    %v64 = vld [vmem:[%s0] sm:$0xff]
    %v65 = vld [vmem:[%s0 + $0xc0] sm:$0xff]
    %s66 = sld [smem:[#allocation3]]
    %v67 = vstv %s66
    %v68 = vmul.f32 %v67, %v64
    %v69 = vmul.f32 %v67, %v65
    %v70 = vadd.f32 %v68, 0.0
    %v71 = vadd.f32 %v69, 0.0
    %s72 = sld [smem:[#allocation3 + $0x1b]]
    %v73 = vstv %s72
    %v74 = vmul.f32 %v73, %v64
    %v75 = vmul.f32 %v73, %v65
    %v76 = vadd.f32 %v74, 0.0
    %v77 = vadd.f32 %v75, 0.0
    %s78 = sld [smem:[#allocation3 + $0x36]]
    %v79 = vstv %s78
    %v80 = vmul.f32 %v79, %v64
    %v81 = vmul.f32 %v79, %v65
    %v82 = vadd.f32 %v80, 0.0
    %v83 = vadd.f32 %v81, 0.0
    %s84 = sld [smem:[#allocation3 + $0x51]]
    %v85 = vstv %s84
    %v86 = vmul.f32 %v85, %v64
    %v87 = vmul.f32 %v85, %v65
    %v88 = vadd.f32 %v86, 0.0
    %v89 = vadd.f32 %v87, 0.0
    %s90 = scalar_lea.vmem %s0, 16
    %v91 = vld [vmem:[%s90] sm:$0xff]
    %v92 = vld [vmem:[%s90 + $0xc0] sm:$0xff]
    %s93 = sld [smem:[#allocation3 + $0x1]]
    %v94 = vstv %s93
    %v95 = vmul.f32 %v94, %v91
    %v96 = vmul.f32 %v94, %v92
    %v97 = vadd.f32 %v70, %v95
    %v98 = vadd.f32 %v71, %v96
    %s99 = sld [smem:[#allocation3 + $0x1c]]
    %v100 = vstv %s99
    %v101 = vmul.f32 %v100, %v91
    %v102 = vmul.f32 %v100, %v92
    %v103 = vadd.f32 %v76, %v101
    %v104 = vadd.f32 %v77, %v102
    %s105 = sld [smem:[#allocation3 + $0x37]]
    %v106 = vstv %s105
    %v107 = vmul.f32 %v106, %v91
    %v108 = vmul.f32 %v106, %v92
    %v109 = vadd.f32 %v82, %v107
    %v110 = vadd.f32 %v83, %v108
    %s111 = sld [smem:[#allocation3 + $0x52]]
    %v112 = vstv %s111
    %v113 = vmul.f32 %v112, %v91
    %v114 = vmul.f32 %v112, %v92
    %v115 = vadd.f32 %v88, %v113
    %v116 = vadd.f32 %v89, %v114
    %s117 = sld [smem:[#allocation3 + $0x2]]
    %v118 = vstv %s117
    %v119 = vmul.f32 %v118, %v64
    %v120 = vmul.f32 %v118, %v65
    %123 = vrot.lane.b32.xlu0 %v119, 127
    %v124 = vpop.permute.xlu0 %123
    %125 = vrot.lane.b32.xlu0 %v120, 127
    %v126 = vpop.permute.xlu0 %125
    %v129 = vadd.f32 %v97, %v124
    %v130 = vadd.f32 %v98, %v126
    %s131 = sld [smem:[#allocation3 + $0x1d]]
    %v132 = vstv %s131
    %v133 = vmul.f32 %v132, %v64
    %v134 = vmul.f32 %v132, %v65
    %137 = vrot.lane.b32.xlu0 %v133, 127
    %v138 = vpop.permute.xlu0 %137
    %139 = vrot.lane.b32.xlu0 %v134, 127
    %v140 = vpop.permute.xlu0 %139
    %v143 = vadd.f32 %v103, %v138
    %v144 = vadd.f32 %v104, %v140
    %s145 = sld [smem:[#allocation3 + $0x38]]
    %v146 = vstv %s145
    %v147 = vmul.f32 %v146, %v64
    %v148 = vmul.f32 %v146, %v65
    %151 = vrot.lane.b32.xlu0 %v147, 127
    %v152 = vpop.permute.xlu0 %151
    %153 = vrot.lane.b32.xlu0 %v148, 127
    %v154 = vpop.permute.xlu0 %153
    %v157 = vadd.f32 %v109, %v152
    %v158 = vadd.f32 %v110, %v154
    %s159 = sld [smem:[#allocation3 + $0x53]]
    %v160 = vstv %s159
    %v161 = vmul.f32 %v160, %v64
    %v162 = vmul.f32 %v160, %v65
    %165 = vrot.lane.b32.xlu0 %v161, 127
    %v166 = vpop.permute.xlu0 %165
    %167 = vrot.lane.b32.xlu0 %v162, 127
    %v168 = vpop.permute.xlu0 %167
    %v171 = vadd.f32 %v115, %v166
    %v172 = vadd.f32 %v116, %v168
    %s173 = scalar_lea.vmem %s0, 32
    %v174 = vld [vmem:[%s173] sm:$0xff]
    %v175 = vld [vmem:[%s173 + $0xc0] sm:$0xff]
    %s176 = sld [smem:[#allocation3 + $0x3]]
    %v177 = vstv %s176
    %v178 = vmul.f32 %v177, %v174
    %v179 = vmul.f32 %v177, %v175
    %v180 = vadd.f32 %v129, %v178
    %v181 = vadd.f32 %v130, %v179
    %s182 = sld [smem:[#allocation3 + $0x1e]]
    %v183 = vstv %s182
    %v184 = vmul.f32 %v183, %v174
    %v185 = vmul.f32 %v183, %v175
    %v186 = vadd.f32 %v143, %v184
    %v187 = vadd.f32 %v144, %v185
    %s188 = sld [smem:[#allocation3 + $0x39]]
    %v189 = vstv %s188
    %v190 = vmul.f32 %v189, %v174
    %v191 = vmul.f32 %v189, %v175
    %v192 = vadd.f32 %v157, %v190
    %v193 = vadd.f32 %v158, %v191
    %s194 = sld [smem:[#allocation3 + $0x54]]
    %v195 = vstv %s194
    %v196 = vmul.f32 %v195, %v174
    %v197 = vmul.f32 %v195, %v175
    %v198 = vadd.f32 %v171, %v196
    %v199 = vadd.f32 %v172, %v197
    %s200 = scalar_lea.vmem %s0, 48
    %v201 = vld [vmem:[%s200] sm:$0xff]
    %v202 = vld [vmem:[%s200 + $0xc0] sm:$0xff]
    %s203 = sld [smem:[#allocation3 + $0x4]]
    %v204 = vstv %s203
    %v205 = vmul.f32 %v204, %v201
    %v206 = vmul.f32 %v204, %v202
    %v207 = vadd.f32 %v180, %v205
    %v208 = vadd.f32 %v181, %v206
    %s209 = sld [smem:[#allocation3 + $0x1f]]
    %v210 = vstv %s209
    %v211 = vmul.f32 %v210, %v201
    %v212 = vmul.f32 %v210, %v202
    %v213 = vadd.f32 %v186, %v211
    %v214 = vadd.f32 %v187, %v212
    %s215 = sld [smem:[#allocation3 + $0x3a]]
    %v216 = vstv %s215
    %v217 = vmul.f32 %v216, %v201
    %v218 = vmul.f32 %v216, %v202
    %v219 = vadd.f32 %v192, %v217
    %v220 = vadd.f32 %v193, %v218
    %s221 = sld [smem:[#allocation3 + $0x55]]
    %v222 = vstv %s221
    %v223 = vmul.f32 %v222, %v201
    %v224 = vmul.f32 %v222, %v202
    %v225 = vadd.f32 %v198, %v223
    %v226 = vadd.f32 %v199, %v224
    %s227 = sld [smem:[#allocation3 + $0x5]]
    %v228 = vstv %s227
    %v229 = vmul.f32 %v228, %v174
    %v230 = vmul.f32 %v228, %v175
    %233 = vrot.lane.b32.xlu0 %v229, 127
    %v234 = vpop.permute.xlu0 %233
    %235 = vrot.lane.b32.xlu0 %v230, 127
    %v236 = vpop.permute.xlu0 %235
    %v239 = vadd.f32 %v207, %v234
    %v240 = vadd.f32 %v208, %v236
    %s241 = sld [smem:[#allocation3 + $0x20]]
    %v242 = vstv %s241
    %v243 = vmul.f32 %v242, %v174
    %v244 = vmul.f32 %v242, %v175
    %247 = vrot.lane.b32.xlu0 %v243, 127
    %v248 = vpop.permute.xlu0 %247
    %249 = vrot.lane.b32.xlu0 %v244, 127
    %v250 = vpop.permute.xlu0 %249
    %v253 = vadd.f32 %v213, %v248
    %v254 = vadd.f32 %v214, %v250
    %s255 = sld [smem:[#allocation3 + $0x3b]]
    %v256 = vstv %s255
    %v257 = vmul.f32 %v256, %v174
    %v258 = vmul.f32 %v256, %v175
    %261 = vrot.lane.b32.xlu0 %v257, 127
    %v262 = vpop.permute.xlu0 %261
    %263 = vrot.lane.b32.xlu0 %v258, 127
    %v264 = vpop.permute.xlu0 %263
    %v267 = vadd.f32 %v219, %v262
    %v268 = vadd.f32 %v220, %v264
    %s269 = sld [smem:[#allocation3 + $0x56]]
    %v270 = vstv %s269
    %v271 = vmul.f32 %v270, %v174
    %v272 = vmul.f32 %v270, %v175
    %275 = vrot.lane.b32.xlu0 %v271, 127
    %v276 = vpop.permute.xlu0 %275
    %277 = vrot.lane.b32.xlu0 %v272, 127
    %v278 = vpop.permute.xlu0 %277
    %v281 = vadd.f32 %v225, %v276
    %v282 = vadd.f32 %v226, %v278
    %v283 = vld [vmem:[%s0 + $0x1] sm:$0xff]
    %v284 = vld [vmem:[%s0 + $0xc1] sm:$0xff]
    %s285 = sld [smem:[#allocation3 + $0x6]]
    %v286 = vstv %s285
    %v287 = vmul.f32 %v286, %v283
    %v288 = vmul.f32 %v286, %v284
    %v289 = vadd.f32 %v239, %v287
    %v290 = vadd.f32 %v240, %v288
    %s291 = sld [smem:[#allocation3 + $0x21]]
    %v292 = vstv %s291
    %v293 = vmul.f32 %v292, %v283
    %v294 = vmul.f32 %v292, %v284
    %v295 = vadd.f32 %v253, %v293
    %v296 = vadd.f32 %v254, %v294
    %s297 = sld [smem:[#allocation3 + $0x3c]]
    %v298 = vstv %s297
    %v299 = vmul.f32 %v298, %v283
    %v300 = vmul.f32 %v298, %v284
    %v301 = vadd.f32 %v267, %v299
    %v302 = vadd.f32 %v268, %v300
    %s303 = sld [smem:[#allocation3 + $0x57]]
    %v304 = vstv %s303
    %v305 = vmul.f32 %v304, %v283
    %v306 = vmul.f32 %v304, %v284
    %v307 = vadd.f32 %v281, %v305
    %v308 = vadd.f32 %v282, %v306
    %v309 = vld [vmem:[%s90 + $0x1] sm:$0xff]
    %v310 = vld [vmem:[%s90 + $0xc1] sm:$0xff]
    %s311 = sld [smem:[#allocation3 + $0x7]]
    %v312 = vstv %s311
    %v313 = vmul.f32 %v312, %v309
    %v314 = vmul.f32 %v312, %v310
    %v315 = vadd.f32 %v289, %v313
    %v316 = vadd.f32 %v290, %v314
    %s317 = sld [smem:[#allocation3 + $0x22]]
    %v318 = vstv %s317
    %v319 = vmul.f32 %v318, %v309
    %v320 = vmul.f32 %v318, %v310
    %v321 = vadd.f32 %v295, %v319
    %v322 = vadd.f32 %v296, %v320
    %s323 = sld [smem:[#allocation3 + $0x3d]]
    %v324 = vstv %s323
    %v325 = vmul.f32 %v324, %v309
    %v326 = vmul.f32 %v324, %v310
    %v327 = vadd.f32 %v301, %v325
    %v328 = vadd.f32 %v302, %v326
    %s329 = sld [smem:[#allocation3 + $0x58]]
    %v330 = vstv %s329
    %v331 = vmul.f32 %v330, %v309
    %v332 = vmul.f32 %v330, %v310
    %v333 = vadd.f32 %v307, %v331
    %v334 = vadd.f32 %v308, %v332
    %s335 = sld [smem:[#allocation3 + $0x8]]
    %v336 = vstv %s335
    %v337 = vmul.f32 %v336, %v283
    %v338 = vmul.f32 %v336, %v284
    %341 = vrot.lane.b32.xlu0 %v337, 127
    %v342 = vpop.permute.xlu0 %341
    %343 = vrot.lane.b32.xlu0 %v338, 127
    %v344 = vpop.permute.xlu0 %343
    %v347 = vadd.f32 %v315, %v342
    %v348 = vadd.f32 %v316, %v344
    %s349 = sld [smem:[#allocation3 + $0x23]]
    %v350 = vstv %s349
    %v351 = vmul.f32 %v350, %v283
    %v352 = vmul.f32 %v350, %v284
    %355 = vrot.lane.b32.xlu0 %v351, 127
    %v356 = vpop.permute.xlu0 %355
    %357 = vrot.lane.b32.xlu0 %v352, 127
    %v358 = vpop.permute.xlu0 %357
    %v361 = vadd.f32 %v321, %v356
    %v362 = vadd.f32 %v322, %v358
    %s363 = sld [smem:[#allocation3 + $0x3e]]
    %v364 = vstv %s363
    %v365 = vmul.f32 %v364, %v283
    %v366 = vmul.f32 %v364, %v284
    %369 = vrot.lane.b32.xlu0 %v365, 127
    %v370 = vpop.permute.xlu0 %369
    %371 = vrot.lane.b32.xlu0 %v366, 127
    %v372 = vpop.permute.xlu0 %371
    %v375 = vadd.f32 %v327, %v370
    %v376 = vadd.f32 %v328, %v372
    %s377 = sld [smem:[#allocation3 + $0x59]]
    %v378 = vstv %s377
    %v379 = vmul.f32 %v378, %v283
    %v380 = vmul.f32 %v378, %v284
    %383 = vrot.lane.b32.xlu0 %v379, 127
    %v384 = vpop.permute.xlu0 %383
    %385 = vrot.lane.b32.xlu0 %v380, 127
    %v386 = vpop.permute.xlu0 %385
    %v389 = vadd.f32 %v333, %v384
    %v390 = vadd.f32 %v334, %v386
    %s391 = scalar_lea.vmem %s0, 64
    %v392 = vld [vmem:[%s391] sm:$0xff]
    %v393 = vld [vmem:[%s391 + $0xc0] sm:$0xff]
    %s394 = sld [smem:[#allocation3 + $0x9]]
    %v395 = vstv %s394
    %v396 = vmul.f32 %v395, %v392
    %v397 = vmul.f32 %v395, %v393
    %v398 = vadd.f32 %v347, %v396
    %v399 = vadd.f32 %v348, %v397
    %s400 = sld [smem:[#allocation3 + $0x24]]
    %v401 = vstv %s400
    %v402 = vmul.f32 %v401, %v392
    %v403 = vmul.f32 %v401, %v393
    %v404 = vadd.f32 %v361, %v402
    %v405 = vadd.f32 %v362, %v403
    %s406 = sld [smem:[#allocation3 + $0x3f]]
    %v407 = vstv %s406
    %v408 = vmul.f32 %v407, %v392
    %v409 = vmul.f32 %v407, %v393
    %v410 = vadd.f32 %v375, %v408
    %v411 = vadd.f32 %v376, %v409
    %s412 = sld [smem:[#allocation3 + $0x5a]]
    %v413 = vstv %s412
    %v414 = vmul.f32 %v413, %v392
    %v415 = vmul.f32 %v413, %v393
    %v416 = vadd.f32 %v389, %v414
    %v417 = vadd.f32 %v390, %v415
    %s418 = scalar_lea.vmem %s0, 80
    %v419 = vld [vmem:[%s418] sm:$0xff]
    %v420 = vld [vmem:[%s418 + $0xc0] sm:$0xff]
    %s421 = sld [smem:[#allocation3 + $0xa]]
    %v422 = vstv %s421
    %v423 = vmul.f32 %v422, %v419
    %v424 = vmul.f32 %v422, %v420
    %v425 = vadd.f32 %v398, %v423
    %v426 = vadd.f32 %v399, %v424
    %s427 = sld [smem:[#allocation3 + $0x25]]
    %v428 = vstv %s427
    %v429 = vmul.f32 %v428, %v419
    %v430 = vmul.f32 %v428, %v420
    %v431 = vadd.f32 %v404, %v429
    %v432 = vadd.f32 %v405, %v430
    %s433 = sld [smem:[#allocation3 + $0x40]]
    %v434 = vstv %s433
    %v435 = vmul.f32 %v434, %v419
    %v436 = vmul.f32 %v434, %v420
    %v437 = vadd.f32 %v410, %v435
    %v438 = vadd.f32 %v411, %v436
    %s439 = sld [smem:[#allocation3 + $0x5b]]
    %v440 = vstv %s439
    %v441 = vmul.f32 %v440, %v419
    %v442 = vmul.f32 %v440, %v420
    %v443 = vadd.f32 %v416, %v441
    %v444 = vadd.f32 %v417, %v442
    %s445 = sld [smem:[#allocation3 + $0xb]]
    %v446 = vstv %s445
    %v447 = vmul.f32 %v446, %v392
    %v448 = vmul.f32 %v446, %v393
    %451 = vrot.lane.b32.xlu0 %v447, 127
    %v452 = vpop.permute.xlu0 %451
    %453 = vrot.lane.b32.xlu0 %v448, 127
    %v454 = vpop.permute.xlu0 %453
    %v457 = vadd.f32 %v425, %v452
    %v458 = vadd.f32 %v426, %v454
    %s459 = sld [smem:[#allocation3 + $0x26]]
    %v460 = vstv %s459
    %v461 = vmul.f32 %v460, %v392
    %v462 = vmul.f32 %v460, %v393
    %465 = vrot.lane.b32.xlu0 %v461, 127
    %v466 = vpop.permute.xlu0 %465
    %467 = vrot.lane.b32.xlu0 %v462, 127
    %v468 = vpop.permute.xlu0 %467
    %v471 = vadd.f32 %v431, %v466
    %v472 = vadd.f32 %v432, %v468
    %s473 = sld [smem:[#allocation3 + $0x41]]
    %v474 = vstv %s473
    %v475 = vmul.f32 %v474, %v392
    %v476 = vmul.f32 %v474, %v393
    %479 = vrot.lane.b32.xlu0 %v475, 127
    %v480 = vpop.permute.xlu0 %479
    %481 = vrot.lane.b32.xlu0 %v476, 127
    %v482 = vpop.permute.xlu0 %481
    %v485 = vadd.f32 %v437, %v480
    %v486 = vadd.f32 %v438, %v482
    %s487 = sld [smem:[#allocation3 + $0x5c]]
    %v488 = vstv %s487
    %v489 = vmul.f32 %v488, %v392
    %v490 = vmul.f32 %v488, %v393
    %493 = vrot.lane.b32.xlu0 %v489, 127
    %v494 = vpop.permute.xlu0 %493
    %495 = vrot.lane.b32.xlu0 %v490, 127
    %v496 = vpop.permute.xlu0 %495
    %v499 = vadd.f32 %v443, %v494
    %v500 = vadd.f32 %v444, %v496
    %s501 = scalar_lea.vmem %s0, 96
    %v502 = vld [vmem:[%s501] sm:$0xff]
    %v503 = vld [vmem:[%s501 + $0xc0] sm:$0xff]
    %s504 = sld [smem:[#allocation3 + $0xc]]
    %v505 = vstv %s504
    %v506 = vmul.f32 %v505, %v502
    %v507 = vmul.f32 %v505, %v503
    %v508 = vadd.f32 %v457, %v506
    %v509 = vadd.f32 %v458, %v507
    %s510 = sld [smem:[#allocation3 + $0x27]]
    %v511 = vstv %s510
    %v512 = vmul.f32 %v511, %v502
    %v513 = vmul.f32 %v511, %v503
    %v514 = vadd.f32 %v471, %v512
    %v515 = vadd.f32 %v472, %v513
    %s516 = sld [smem:[#allocation3 + $0x42]]
    %v517 = vstv %s516
    %v518 = vmul.f32 %v517, %v502
    %v519 = vmul.f32 %v517, %v503
    %v520 = vadd.f32 %v485, %v518
    %v521 = vadd.f32 %v486, %v519
    %s522 = sld [smem:[#allocation3 + $0x5d]]
    %v523 = vstv %s522
    %v524 = vmul.f32 %v523, %v502
    %v525 = vmul.f32 %v523, %v503
    %v526 = vadd.f32 %v499, %v524
    %v527 = vadd.f32 %v500, %v525
    %s528 = scalar_lea.vmem %s0, 112
    %v529 = vld [vmem:[%s528] sm:$0xff]
    %v530 = vld [vmem:[%s528 + $0xc0] sm:$0xff]
    %s531 = sld [smem:[#allocation3 + $0xd]]
    %v532 = vstv %s531
    %v533 = vmul.f32 %v532, %v529
    %v534 = vmul.f32 %v532, %v530
    %v535 = vadd.f32 %v508, %v533
    %v536 = vadd.f32 %v509, %v534
    %s537 = sld [smem:[#allocation3 + $0x28]]
    %v538 = vstv %s537
    %v539 = vmul.f32 %v538, %v529
    %v540 = vmul.f32 %v538, %v530
    %v541 = vadd.f32 %v514, %v539
    %v542 = vadd.f32 %v515, %v540
    %s543 = sld [smem:[#allocation3 + $0x43]]
    %v544 = vstv %s543
    %v545 = vmul.f32 %v544, %v529
    %v546 = vmul.f32 %v544, %v530
    %v547 = vadd.f32 %v520, %v545
    %v548 = vadd.f32 %v521, %v546
    %s549 = sld [smem:[#allocation3 + $0x5e]]
    %v550 = vstv %s549
    %v551 = vmul.f32 %v550, %v529
    %v552 = vmul.f32 %v550, %v530
    %v553 = vadd.f32 %v526, %v551
    %v554 = vadd.f32 %v527, %v552
    %s555 = sld [smem:[#allocation3 + $0xe]]
    %v556 = vstv %s555
    %v557 = vmul.f32 %v556, %v502
    %v558 = vmul.f32 %v556, %v503
    %561 = vrot.lane.b32.xlu0 %v557, 127
    %v562 = vpop.permute.xlu0 %561
    %563 = vrot.lane.b32.xlu0 %v558, 127
    %v564 = vpop.permute.xlu0 %563
    %v567 = vadd.f32 %v535, %v562
    %v568 = vadd.f32 %v536, %v564
    %s569 = sld [smem:[#allocation3 + $0x29]]
    %v570 = vstv %s569
    %v571 = vmul.f32 %v570, %v502
    %v572 = vmul.f32 %v570, %v503
    %575 = vrot.lane.b32.xlu0 %v571, 127
    %v576 = vpop.permute.xlu0 %575
    %577 = vrot.lane.b32.xlu0 %v572, 127
    %v578 = vpop.permute.xlu0 %577
    %v581 = vadd.f32 %v541, %v576
    %v582 = vadd.f32 %v542, %v578
    %s583 = sld [smem:[#allocation3 + $0x44]]
    %v584 = vstv %s583
    %v585 = vmul.f32 %v584, %v502
    %v586 = vmul.f32 %v584, %v503
    %589 = vrot.lane.b32.xlu0 %v585, 127
    %v590 = vpop.permute.xlu0 %589
    %591 = vrot.lane.b32.xlu0 %v586, 127
    %v592 = vpop.permute.xlu0 %591
    %v595 = vadd.f32 %v547, %v590
    %v596 = vadd.f32 %v548, %v592
    %s597 = sld [smem:[#allocation3 + $0x5f]]
    %v598 = vstv %s597
    %v599 = vmul.f32 %v598, %v502
    %v600 = vmul.f32 %v598, %v503
    %603 = vrot.lane.b32.xlu0 %v599, 127
    %v604 = vpop.permute.xlu0 %603
    %605 = vrot.lane.b32.xlu0 %v600, 127
    %v606 = vpop.permute.xlu0 %605
    %v609 = vadd.f32 %v553, %v604
    %v610 = vadd.f32 %v554, %v606
    %v611 = vld [vmem:[%s391 + $0x1] sm:$0xff]
    %v612 = vld [vmem:[%s391 + $0xc1] sm:$0xff]
    %s613 = sld [smem:[#allocation3 + $0xf]]
    %v614 = vstv %s613
    %v615 = vmul.f32 %v614, %v611
    %v616 = vmul.f32 %v614, %v612
    %v617 = vadd.f32 %v567, %v615
    %v618 = vadd.f32 %v568, %v616
    %s619 = sld [smem:[#allocation3 + $0x2a]]
    %v620 = vstv %s619
    %v621 = vmul.f32 %v620, %v611
    %v622 = vmul.f32 %v620, %v612
    %v623 = vadd.f32 %v581, %v621
    %v624 = vadd.f32 %v582, %v622
    %s625 = sld [smem:[#allocation3 + $0x45]]
    %v626 = vstv %s625
    %v627 = vmul.f32 %v626, %v611
    %v628 = vmul.f32 %v626, %v612
    %v629 = vadd.f32 %v595, %v627
    %v630 = vadd.f32 %v596, %v628
    %s631 = sld [smem:[#allocation3 + $0x60]]
    %v632 = vstv %s631
    %v633 = vmul.f32 %v632, %v611
    %v634 = vmul.f32 %v632, %v612
    %v635 = vadd.f32 %v609, %v633
    %v636 = vadd.f32 %v610, %v634
    %v637 = vld [vmem:[%s418 + $0x1] sm:$0xff]
    %v638 = vld [vmem:[%s418 + $0xc1] sm:$0xff]
    %s639 = sld [smem:[#allocation3 + $0x10]]
    %v640 = vstv %s639
    %v641 = vmul.f32 %v640, %v637
    %v642 = vmul.f32 %v640, %v638
    %v643 = vadd.f32 %v617, %v641
    %v644 = vadd.f32 %v618, %v642
    %s645 = sld [smem:[#allocation3 + $0x2b]]
    %v646 = vstv %s645
    %v647 = vmul.f32 %v646, %v637
    %v648 = vmul.f32 %v646, %v638
    %v649 = vadd.f32 %v623, %v647
    %v650 = vadd.f32 %v624, %v648
    %s651 = sld [smem:[#allocation3 + $0x46]]
    %v652 = vstv %s651
    %v653 = vmul.f32 %v652, %v637
    %v654 = vmul.f32 %v652, %v638
    %v655 = vadd.f32 %v629, %v653
    %v656 = vadd.f32 %v630, %v654
    %s657 = sld [smem:[#allocation3 + $0x61]]
    %v658 = vstv %s657
    %v659 = vmul.f32 %v658, %v637
    %v660 = vmul.f32 %v658, %v638
    %v661 = vadd.f32 %v635, %v659
    %v662 = vadd.f32 %v636, %v660
    %s663 = sld [smem:[#allocation3 + $0x11]]
    %v664 = vstv %s663
    %v665 = vmul.f32 %v664, %v611
    %v666 = vmul.f32 %v664, %v612
    %669 = vrot.lane.b32.xlu0 %v665, 127
    %v670 = vpop.permute.xlu0 %669
    %671 = vrot.lane.b32.xlu0 %v666, 127
    %v672 = vpop.permute.xlu0 %671
    %v675 = vadd.f32 %v643, %v670
    %v676 = vadd.f32 %v644, %v672
    %s677 = sld [smem:[#allocation3 + $0x2c]]
    %v678 = vstv %s677
    %v679 = vmul.f32 %v678, %v611
    %v680 = vmul.f32 %v678, %v612
    %683 = vrot.lane.b32.xlu0 %v679, 127
    %v684 = vpop.permute.xlu0 %683
    %685 = vrot.lane.b32.xlu0 %v680, 127
    %v686 = vpop.permute.xlu0 %685
    %v689 = vadd.f32 %v649, %v684
    %v690 = vadd.f32 %v650, %v686
    %s691 = sld [smem:[#allocation3 + $0x47]]
    %v692 = vstv %s691
    %v693 = vmul.f32 %v692, %v611
    %v694 = vmul.f32 %v692, %v612
    %697 = vrot.lane.b32.xlu0 %v693, 127
    %v698 = vpop.permute.xlu0 %697
    %699 = vrot.lane.b32.xlu0 %v694, 127
    %v700 = vpop.permute.xlu0 %699
    %v703 = vadd.f32 %v655, %v698
    %v704 = vadd.f32 %v656, %v700
    %s705 = sld [smem:[#allocation3 + $0x62]]
    %v706 = vstv %s705
    %v707 = vmul.f32 %v706, %v611
    %v708 = vmul.f32 %v706, %v612
    %711 = vrot.lane.b32.xlu0 %v707, 127
    %v712 = vpop.permute.xlu0 %711
    %713 = vrot.lane.b32.xlu0 %v708, 127
    %v714 = vpop.permute.xlu0 %713
    %v717 = vadd.f32 %v661, %v712
    %v718 = vadd.f32 %v662, %v714
    %s719 = scalar_lea.vmem %s0, 128
    %v720 = vld [vmem:[%s719] sm:$0xff]
    %v721 = vld [vmem:[%s719 + $0xc0] sm:$0xff]
    %s722 = sld [smem:[#allocation3 + $0x12]]
    %v723 = vstv %s722
    %v724 = vmul.f32 %v723, %v720
    %v725 = vmul.f32 %v723, %v721
    %v726 = vadd.f32 %v675, %v724
    %v727 = vadd.f32 %v676, %v725
    %s728 = sld [smem:[#allocation3 + $0x2d]]
    %v729 = vstv %s728
    %v730 = vmul.f32 %v729, %v720
    %v731 = vmul.f32 %v729, %v721
    %v732 = vadd.f32 %v689, %v730
    %v733 = vadd.f32 %v690, %v731
    %s734 = sld [smem:[#allocation3 + $0x48]]
    %v735 = vstv %s734
    %v736 = vmul.f32 %v735, %v720
    %v737 = vmul.f32 %v735, %v721
    %v738 = vadd.f32 %v703, %v736
    %v739 = vadd.f32 %v704, %v737
    %s740 = sld [smem:[#allocation3 + $0x63]]
    %v741 = vstv %s740
    %v742 = vmul.f32 %v741, %v720
    %v743 = vmul.f32 %v741, %v721
    %v744 = vadd.f32 %v717, %v742
    %v745 = vadd.f32 %v718, %v743
    %s746 = scalar_lea.vmem %s0, 144
    %v747 = vld [vmem:[%s746] sm:$0xff]
    %v748 = vld [vmem:[%s746 + $0xc0] sm:$0xff]
    %s749 = sld [smem:[#allocation3 + $0x13]]
    %v750 = vstv %s749
    %v751 = vmul.f32 %v750, %v747
    %v752 = vmul.f32 %v750, %v748
    %v753 = vadd.f32 %v726, %v751
    %v754 = vadd.f32 %v727, %v752
    %s755 = sld [smem:[#allocation3 + $0x2e]]
    %v756 = vstv %s755
    %v757 = vmul.f32 %v756, %v747
    %v758 = vmul.f32 %v756, %v748
    %v759 = vadd.f32 %v732, %v757
    %v760 = vadd.f32 %v733, %v758
    %s761 = sld [smem:[#allocation3 + $0x49]]
    %v762 = vstv %s761
    %v763 = vmul.f32 %v762, %v747
    %v764 = vmul.f32 %v762, %v748
    %v765 = vadd.f32 %v738, %v763
    %v766 = vadd.f32 %v739, %v764
    %s767 = sld [smem:[#allocation3 + $0x64]]
    %v768 = vstv %s767
    %v769 = vmul.f32 %v768, %v747
    %v770 = vmul.f32 %v768, %v748
    %v771 = vadd.f32 %v744, %v769
    %v772 = vadd.f32 %v745, %v770
    %s773 = sld [smem:[#allocation3 + $0x14]]
    %v774 = vstv %s773
    %v775 = vmul.f32 %v774, %v720
    %v776 = vmul.f32 %v774, %v721
    %779 = vrot.lane.b32.xlu0 %v775, 127
    %v780 = vpop.permute.xlu0 %779
    %781 = vrot.lane.b32.xlu0 %v776, 127
    %v782 = vpop.permute.xlu0 %781
    %v785 = vadd.f32 %v753, %v780
    %v786 = vadd.f32 %v754, %v782
    %s787 = sld [smem:[#allocation3 + $0x2f]]
    %v788 = vstv %s787
    %v789 = vmul.f32 %v788, %v720
    %v790 = vmul.f32 %v788, %v721
    %793 = vrot.lane.b32.xlu0 %v789, 127
    %v794 = vpop.permute.xlu0 %793
    %795 = vrot.lane.b32.xlu0 %v790, 127
    %v796 = vpop.permute.xlu0 %795
    %v799 = vadd.f32 %v759, %v794
    %v800 = vadd.f32 %v760, %v796
    %s801 = sld [smem:[#allocation3 + $0x4a]]
    %v802 = vstv %s801
    %v803 = vmul.f32 %v802, %v720
    %v804 = vmul.f32 %v802, %v721
    %807 = vrot.lane.b32.xlu0 %v803, 127
    %v808 = vpop.permute.xlu0 %807
    %809 = vrot.lane.b32.xlu0 %v804, 127
    %v810 = vpop.permute.xlu0 %809
    %v813 = vadd.f32 %v765, %v808
    %v814 = vadd.f32 %v766, %v810
    %s815 = sld [smem:[#allocation3 + $0x65]]
    %v816 = vstv %s815
    %v817 = vmul.f32 %v816, %v720
    %v818 = vmul.f32 %v816, %v721
    %821 = vrot.lane.b32.xlu0 %v817, 127
    %v822 = vpop.permute.xlu0 %821
    %823 = vrot.lane.b32.xlu0 %v818, 127
    %v824 = vpop.permute.xlu0 %823
    %v827 = vadd.f32 %v771, %v822
    %v828 = vadd.f32 %v772, %v824
    %s829 = scalar_lea.vmem %s0, 160
    %v830 = vld [vmem:[%s829] sm:$0xff]
    %v831 = vld [vmem:[%s829 + $0xc0] sm:$0xff]
    %s832 = sld [smem:[#allocation3 + $0x15]]
    %v833 = vstv %s832
    %v834 = vmul.f32 %v833, %v830
    %v835 = vmul.f32 %v833, %v831
    %v836 = vadd.f32 %v785, %v834
    %v837 = vadd.f32 %v786, %v835
    %s838 = sld [smem:[#allocation3 + $0x30]]
    %v839 = vstv %s838
    %v840 = vmul.f32 %v839, %v830
    %v841 = vmul.f32 %v839, %v831
    %v842 = vadd.f32 %v799, %v840
    %v843 = vadd.f32 %v800, %v841
    %s844 = sld [smem:[#allocation3 + $0x4b]]
    %v845 = vstv %s844
    %v846 = vmul.f32 %v845, %v830
    %v847 = vmul.f32 %v845, %v831
    %v848 = vadd.f32 %v813, %v846
    %v849 = vadd.f32 %v814, %v847
    %s850 = sld [smem:[#allocation3 + $0x66]]
    %v851 = vstv %s850
    %v852 = vmul.f32 %v851, %v830
    %v853 = vmul.f32 %v851, %v831
    %v854 = vadd.f32 %v827, %v852
    %v855 = vadd.f32 %v828, %v853
    %s856 = scalar_lea.vmem %s0, 176
    %v857 = vld [vmem:[%s856] sm:$0xff]
    %v858 = vld [vmem:[%s856 + $0xc0] sm:$0xff]
    %s859 = sld [smem:[#allocation3 + $0x16]]
    %v860 = vstv %s859
    %v861 = vmul.f32 %v860, %v857
    %v862 = vmul.f32 %v860, %v858
    %v863 = vadd.f32 %v836, %v861
    %v864 = vadd.f32 %v837, %v862
    %s865 = sld [smem:[#allocation3 + $0x31]]
    %v866 = vstv %s865
    %v867 = vmul.f32 %v866, %v857
    %v868 = vmul.f32 %v866, %v858
    %v869 = vadd.f32 %v842, %v867
    %v870 = vadd.f32 %v843, %v868
    %s871 = sld [smem:[#allocation3 + $0x4c]]
    %v872 = vstv %s871
    %v873 = vmul.f32 %v872, %v857
    %v874 = vmul.f32 %v872, %v858
    %v875 = vadd.f32 %v848, %v873
    %v876 = vadd.f32 %v849, %v874
    %s877 = sld [smem:[#allocation3 + $0x67]]
    %v878 = vstv %s877
    %v879 = vmul.f32 %v878, %v857
    %v880 = vmul.f32 %v878, %v858
    %v881 = vadd.f32 %v854, %v879
    %v882 = vadd.f32 %v855, %v880
    %s883 = sld [smem:[#allocation3 + $0x17]]
    %v884 = vstv %s883
    %v885 = vmul.f32 %v884, %v830
    %v886 = vmul.f32 %v884, %v831
    %889 = vrot.lane.b32.xlu0 %v885, 127
    %v890 = vpop.permute.xlu0 %889
    %891 = vrot.lane.b32.xlu0 %v886, 127
    %v892 = vpop.permute.xlu0 %891
    %v895 = vadd.f32 %v863, %v890
    %v896 = vadd.f32 %v864, %v892
    %s897 = sld [smem:[#allocation3 + $0x32]]
    %v898 = vstv %s897
    %v899 = vmul.f32 %v898, %v830
    %v900 = vmul.f32 %v898, %v831
    %903 = vrot.lane.b32.xlu0 %v899, 127
    %v904 = vpop.permute.xlu0 %903
    %905 = vrot.lane.b32.xlu0 %v900, 127
    %v906 = vpop.permute.xlu0 %905
    %v909 = vadd.f32 %v869, %v904
    %v910 = vadd.f32 %v870, %v906
    %s911 = sld [smem:[#allocation3 + $0x4d]]
    %v912 = vstv %s911
    %v913 = vmul.f32 %v912, %v830
    %v914 = vmul.f32 %v912, %v831
    %917 = vrot.lane.b32.xlu0 %v913, 127
    %v918 = vpop.permute.xlu0 %917
    %919 = vrot.lane.b32.xlu0 %v914, 127
    %v920 = vpop.permute.xlu0 %919
    %v923 = vadd.f32 %v875, %v918
    %v924 = vadd.f32 %v876, %v920
    %s925 = sld [smem:[#allocation3 + $0x68]]
    %v926 = vstv %s925
    %v927 = vmul.f32 %v926, %v830
    %v928 = vmul.f32 %v926, %v831
    %931 = vrot.lane.b32.xlu0 %v927, 127
    %v932 = vpop.permute.xlu0 %931
    %933 = vrot.lane.b32.xlu0 %v928, 127
    %v934 = vpop.permute.xlu0 %933
    %v937 = vadd.f32 %v881, %v932
    %v938 = vadd.f32 %v882, %v934
    %v939 = vld [vmem:[%s719 + $0x1] sm:$0xff]
    %v940 = vld [vmem:[%s719 + $0xc1] sm:$0xff]
    %s941 = sld [smem:[#allocation3 + $0x18]]
    %v942 = vstv %s941
    %v943 = vmul.f32 %v942, %v939
    %v944 = vmul.f32 %v942, %v940
    %v945 = vadd.f32 %v895, %v943
    %v946 = vadd.f32 %v896, %v944
    %s947 = sld [smem:[#allocation3 + $0x33]]
    %v948 = vstv %s947
    %v949 = vmul.f32 %v948, %v939
    %v950 = vmul.f32 %v948, %v940
    %v951 = vadd.f32 %v909, %v949
    %v952 = vadd.f32 %v910, %v950
    %s953 = sld [smem:[#allocation3 + $0x4e]]
    %v954 = vstv %s953
    %v955 = vmul.f32 %v954, %v939
    %v956 = vmul.f32 %v954, %v940
    %v957 = vadd.f32 %v923, %v955
    %v958 = vadd.f32 %v924, %v956
    %s959 = sld [smem:[#allocation3 + $0x69]]
    %v960 = vstv %s959
    %v961 = vmul.f32 %v960, %v939
    %v962 = vmul.f32 %v960, %v940
    %v963 = vadd.f32 %v937, %v961
    %v964 = vadd.f32 %v938, %v962
    %v965 = vld [vmem:[%s746 + $0x1] sm:$0xff]
    %v966 = vld [vmem:[%s746 + $0xc1] sm:$0xff]
    %s967 = sld [smem:[#allocation3 + $0x19]]
    %v968 = vstv %s967
    %v969 = vmul.f32 %v968, %v965
    %v970 = vmul.f32 %v968, %v966
    %v971 = vadd.f32 %v945, %v969
    %v972 = vadd.f32 %v946, %v970
    %s973 = sld [smem:[#allocation3 + $0x34]]
    %v974 = vstv %s973
    %v975 = vmul.f32 %v974, %v965
    %v976 = vmul.f32 %v974, %v966
    %v977 = vadd.f32 %v951, %v975
    %v978 = vadd.f32 %v952, %v976
    %s979 = sld [smem:[#allocation3 + $0x4f]]
    %v980 = vstv %s979
    %v981 = vmul.f32 %v980, %v965
    %v982 = vmul.f32 %v980, %v966
    %v983 = vadd.f32 %v957, %v981
    %v984 = vadd.f32 %v958, %v982
    %s985 = sld [smem:[#allocation3 + $0x6a]]
    %v986 = vstv %s985
    %v987 = vmul.f32 %v986, %v965
    %v988 = vmul.f32 %v986, %v966
    %v989 = vadd.f32 %v963, %v987
    %v990 = vadd.f32 %v964, %v988
    %s991 = sld [smem:[#allocation3 + $0x1a]]
    %v992 = vstv %s991
    %v993 = vmul.f32 %v992, %v939
    %v994 = vmul.f32 %v992, %v940
    %997 = vrot.lane.b32.xlu0 %v993, 127
    %v998 = vpop.permute.xlu0 %997
    %999 = vrot.lane.b32.xlu0 %v994, 127
    %v1000 = vpop.permute.xlu0 %999
    %v1003 = vadd.f32 %v971, %v998
    %v1004 = vadd.f32 %v972, %v1000
    %s1005 = sld [smem:[#allocation3 + $0x35]]
    %v1006 = vstv %s1005
    %v1007 = vmul.f32 %v1006, %v939
    %v1008 = vmul.f32 %v1006, %v940
    %1011 = vrot.lane.b32.xlu0 %v1007, 127
    %v1012 = vpop.permute.xlu0 %1011
    %1013 = vrot.lane.b32.xlu0 %v1008, 127
    %v1014 = vpop.permute.xlu0 %1013
    %v1017 = vadd.f32 %v977, %v1012
    %v1018 = vadd.f32 %v978, %v1014
    %s1019 = sld [smem:[#allocation3 + $0x50]]
    %v1020 = vstv %s1019
    %v1021 = vmul.f32 %v1020, %v939
    %v1022 = vmul.f32 %v1020, %v940
    %1025 = vrot.lane.b32.xlu0 %v1021, 127
    %v1026 = vpop.permute.xlu0 %1025
    %1027 = vrot.lane.b32.xlu0 %v1022, 127
    %v1028 = vpop.permute.xlu0 %1027
    %v1031 = vadd.f32 %v983, %v1026
    %v1032 = vadd.f32 %v984, %v1028
    %s1033 = sld [smem:[#allocation3 + $0x6b]]
    %v1034 = vstv %s1033
    %v1035 = vmul.f32 %v1034, %v939
    %v1036 = vmul.f32 %v1034, %v940
    %1039 = vrot.lane.b32.xlu0 %v1035, 127
    %v1040 = vpop.permute.xlu0 %1039
    %1041 = vrot.lane.b32.xlu0 %v1036, 127
    %v1042 = vpop.permute.xlu0 %1041
    %v1045 = vadd.f32 %v989, %v1040
    %v1046 = vadd.f32 %v990, %v1042
    %s1047 = sld [smem:[#allocation6]]
    %v1048 = vstv %s1047
    %v1049 = vadd.f32 %v1003, %v1048
    %v1050 = vadd.f32 %v1004, %v1048
    %v1051 = vmax.f32 %v1049, 0.0
    %v1052 = vmax.f32 %v1050, 0.0
    %1054 = vrot.lane.b32.xlu0 %v1051, 1
    %v1055 = vpop.permute.xlu0 %1054
    %vm1057 = vcmask 72712
    %1058 = vst.msk [vmem:[#allocation2 + $0x1] sm:$0xff] %vm1057, %v1055
    %1060 = vrot.lane.b32.xlu0 %v1052, 1
    %v1061 = vpop.permute.xlu0 %1060
    %s1063 = scalar_lea.vmem [#allocation2], 64
    %1064 = vst.msk [vmem:[%s1063 + $0x1] sm:$0xff] %vm1057, %v1061
    %s1065 = sld [smem:[#allocation6 + $0x1]]
    %v1066 = vstv %s1065
    %v1067 = vadd.f32 %v1017, %v1066
    %v1068 = vadd.f32 %v1018, %v1066
    %v1069 = vmax.f32 %v1067, 0.0
    %v1070 = vmax.f32 %v1068, 0.0
    %1072 = vrot.lane.b32.xlu0 %v1069, 1
    %v1073 = vpop.permute.xlu0 %1072
    %s1075 = scalar_lea.vmem [#allocation2], 16
    %1076 = vst.msk [vmem:[%s1075 + $0x1] sm:$0xff] %vm1057, %v1073
    %1078 = vrot.lane.b32.xlu0 %v1070, 1
    %v1079 = vpop.permute.xlu0 %1078
    %s1081 = scalar_lea.vmem [#allocation2], 80
    %1082 = vst.msk [vmem:[%s1081 + $0x1] sm:$0xff] %vm1057, %v1079
    %s1083 = sld [smem:[#allocation6 + $0x2]]
    %v1084 = vstv %s1083
    %v1085 = vadd.f32 %v1031, %v1084
    %v1086 = vadd.f32 %v1032, %v1084
    %v1087 = vmax.f32 %v1085, 0.0
    %v1088 = vmax.f32 %v1086, 0.0
    %1090 = vrot.lane.b32.xlu0 %v1087, 1
    %v1091 = vpop.permute.xlu0 %1090
    %s1093 = scalar_lea.vmem [#allocation2], 32
    %1094 = vst.msk [vmem:[%s1093 + $0x1] sm:$0xff] %vm1057, %v1091
    %1096 = vrot.lane.b32.xlu0 %v1088, 1
    %v1097 = vpop.permute.xlu0 %1096
    %s1099 = scalar_lea.vmem [#allocation2], 96
    %1100 = vst.msk [vmem:[%s1099 + $0x1] sm:$0xff] %vm1057, %v1097
    %s1101 = sld [smem:[#allocation6 + $0x3]]
    %v1102 = vstv %s1101
    %v1103 = vadd.f32 %v1045, %v1102
    %v1104 = vadd.f32 %v1046, %v1102
    %v1105 = vmax.f32 %v1103, 0.0
    %v1106 = vmax.f32 %v1104, 0.0
    %1108 = vrot.lane.b32.xlu0 %v1105, 1
    %v1109 = vpop.permute.xlu0 %1108
    %s1111 = scalar_lea.vmem [#allocation2], 48
    %1112 = vst.msk [vmem:[%s1111 + $0x1] sm:$0xff] %vm1057, %v1109
    %1114 = vrot.lane.b32.xlu0 %v1106, 1
    %v1115 = vpop.permute.xlu0 %1114
    %s1117 = scalar_lea.vmem [#allocation2], 112
    %1118 = vst.msk [vmem:[%s1117 + $0x1] sm:$0xff] %vm1057, %v1115
    %v1119 = vld [vmem:[%s3] sm:$0x1f]
    %v1120 = vld [vmem:[%s3 + $0x8] sm:$0x1f]
    %v1121 = vld [vmem:[%s3 + $0x10] sm:$0x1f]
    %v1122 = vld [vmem:[%s3 + $0x18] sm:$0x1f]
    %v1123 = vld [vmem:[%s3 + $0x20] sm:$0x1f]
    %v1124 = vld [vmem:[%s3 + $0x28] sm:$0x1f]
    %v1125 = vld [vmem:[%s3 + $0x30] sm:$0x1f]
    %v1126 = vld [vmem:[%s3 + $0x38] sm:$0x1f]
    %v1127 = vld [vmem:[%s3 + $0x40] sm:$0x1f]
    %v1128 = vld [vmem:[%s3 + $0x48] sm:$0x1f]
    %v1129 = vld [vmem:[%s3 + $0x50] sm:$0x1f]
    %v1130 = vld [vmem:[%s3 + $0x58] sm:$0x1f]
    %v1131 = vld [vmem:[%s3 + $0x60] sm:$0x1f]
    %v1132 = vld [vmem:[%s3 + $0x68] sm:$0x1f]
    %v1133 = vld [vmem:[%s3 + $0x70] sm:$0x1f]
    %v1134 = vld [vmem:[%s3 + $0x78] sm:$0x1f]
    %v1135 = vld [vmem:[%s3 + $0x80] sm:$0x1f]
    %v1136 = vld [vmem:[%s3 + $0x88] sm:$0x1f]
    %v1137 = vld [vmem:[%s3 + $0x90] sm:$0x1f]
    %v1138 = vld [vmem:[%s3 + $0x98] sm:$0x1f]
    %v1139 = vld [vmem:[%s3 + $0xa0] sm:$0x1f]
    %v1140 = vld [vmem:[%s3 + $0xa8] sm:$0x1f]
    %v1141 = vld [vmem:[%s3 + $0xb0] sm:$0x1f]
    %v1142 = vld [vmem:[%s3 + $0xb8] sm:$0x1f]
    %v1143 = vld [vmem:[%s3 + $0xc0] sm:$0x1f]
    %v1144 = vld [vmem:[%s3 + $0xc8] sm:$0x1f]
    %v1145 = vld [vmem:[%s3 + $0xd0] sm:$0x1f]
    %v1146 = vld [vmem:[%s3 + $0xd8] sm:$0x1f]
    %v1147 = vld [vmem:[%s3 + $0xe0] sm:$0x1f]
    %v1148 = vld [vmem:[%s3 + $0xe8] sm:$0x1f]
    %v1149 = vld [vmem:[%s3 + $0xf0] sm:$0x1f]
    %v1150 = vld [vmem:[%s3 + $0xf8] sm:$0x1f]
    %v1151 = vld [vmem:[%s4] sm:$0x1]
    %v1152 = vld [vmem:[#allocation2] sm:$0x1f]
    %v1153 = vld [vmem:[#allocation2 + $0x10] sm:$0x1f]
    %v1154 = vld [vmem:[#allocation2 + $0x20] sm:$0x1f]
    %v1155 = vld [vmem:[#allocation2 + $0x30] sm:$0x1f]
    %v1156 = vld [vmem:[#allocation2 + $0x40] sm:$0x1f]
    %v1157 = vld [vmem:[#allocation2 + $0x50] sm:$0x1f]
    %v1158 = vld [vmem:[#allocation2 + $0x60] sm:$0x1f]
    %v1159 = vld [vmem:[#allocation2 + $0x70] sm:$0x1f]
    %v1160 = vmul.f32 %v1119, %v1152
    %v1161 = vmul.f32 %v1127, %v1152
    %v1162 = vmul.f32 %v1135, %v1152
    %v1163 = vmul.f32 %v1143, %v1152
    %v1164 = vadd.f32 %v1160, 0.0
    %v1165 = vadd.f32 %v1161, 0.0
    %v1166 = vadd.f32 %v1162, 0.0
    %v1167 = vadd.f32 %v1163, 0.0
    %v1168 = vmul.f32 %v1120, %v1153
    %v1169 = vmul.f32 %v1128, %v1153
    %v1170 = vmul.f32 %v1136, %v1153
    %v1171 = vmul.f32 %v1144, %v1153
    %v1172 = vadd.f32 %v1164, %v1168
    %v1173 = vadd.f32 %v1165, %v1169
    %v1174 = vadd.f32 %v1166, %v1170
    %v1175 = vadd.f32 %v1167, %v1171
    %v1176 = vmul.f32 %v1121, %v1154
    %v1177 = vmul.f32 %v1129, %v1154
    %v1178 = vmul.f32 %v1137, %v1154
    %v1179 = vmul.f32 %v1145, %v1154
    %v1180 = vadd.f32 %v1172, %v1176
    %v1181 = vadd.f32 %v1173, %v1177
    %v1182 = vadd.f32 %v1174, %v1178
    %v1183 = vadd.f32 %v1175, %v1179
    %v1184 = vmul.f32 %v1122, %v1155
    %v1185 = vmul.f32 %v1130, %v1155
    %v1186 = vmul.f32 %v1138, %v1155
    %v1187 = vmul.f32 %v1146, %v1155
    %v1188 = vadd.f32 %v1180, %v1184
    %v1189 = vadd.f32 %v1181, %v1185
    %v1190 = vadd.f32 %v1182, %v1186
    %v1191 = vadd.f32 %v1183, %v1187
    %v1192 = vmul.f32 %v1123, %v1156
    %v1193 = vmul.f32 %v1131, %v1156
    %v1194 = vmul.f32 %v1139, %v1156
    %v1195 = vmul.f32 %v1147, %v1156
    %v1196 = vadd.f32 %v1188, %v1192
    %v1197 = vadd.f32 %v1189, %v1193
    %v1198 = vadd.f32 %v1190, %v1194
    %v1199 = vadd.f32 %v1191, %v1195
    %v1200 = vmul.f32 %v1124, %v1157
    %v1201 = vmul.f32 %v1132, %v1157
    %v1202 = vmul.f32 %v1140, %v1157
    %v1203 = vmul.f32 %v1148, %v1157
    %v1204 = vadd.f32 %v1196, %v1200
    %v1205 = vadd.f32 %v1197, %v1201
    %v1206 = vadd.f32 %v1198, %v1202
    %v1207 = vadd.f32 %v1199, %v1203
    %v1208 = vmul.f32 %v1125, %v1158
    %v1209 = vmul.f32 %v1133, %v1158
    %v1210 = vmul.f32 %v1141, %v1158
    %v1211 = vmul.f32 %v1149, %v1158
    %v1212 = vadd.f32 %v1204, %v1208
    %v1213 = vadd.f32 %v1205, %v1209
    %v1214 = vadd.f32 %v1206, %v1210
    %v1215 = vadd.f32 %v1207, %v1211
    %v1216 = vmul.f32 %v1126, %v1159
    %v1217 = vmul.f32 %v1134, %v1159
    %v1218 = vmul.f32 %v1142, %v1159
    %v1219 = vmul.f32 %v1150, %v1159
    %v1220 = vadd.f32 %v1212, %v1216
    %v1221 = vadd.f32 %v1213, %v1217
    %v1222 = vadd.f32 %v1214, %v1218
    %v1223 = vadd.f32 %v1215, %v1219
    %vm1224 = vcmask 36864
    %v1225 = vsel %vm1224, %v1220, 0.0
    %1226 = vadd.xlane.f32.xlu0 %v1225
    %v1227 = vpop.xlane.xlu0 %1226
    %v1228 = vsel %vm1224, %v1221, 0.0
    %1229 = vadd.xlane.f32.xlu0 %v1228
    %v1230 = vpop.xlane.xlu0 %1229
    %v1231 = vsel %vm1224, %v1222, 0.0
    %1232 = vadd.xlane.f32.xlu0 %v1231
    %v1233 = vpop.xlane.xlu0 %1232
    %v1234 = vsel %vm1224, %v1223, 0.0
    %1235 = vadd.xlane.f32.xlu0 %v1234
    %v1236 = vpop.xlane.xlu0 %1235
    %v1241 = vlaneseq
    %v1242 = vand.u32 %v1241, 127
    %v1243 = vperm.slane %v1227, %v1242
    %v1244 = vperm.slane %v1230, %v1242
    %v1245 = vperm.slane %v1233, %v1242
    %v1246 = vperm.slane %v1236, %v1242
    %vm1247 = vcmask 1041409
    %v1248 = vsel %vm1247, %v1244, %v1243
    %vm1249 = vcmask 1042434
    %v1250 = vsel %vm1249, %v1245, %v1248
    %vm1251 = vcmask 1043459
    %v1252 = vsel %vm1251, %v1246, %v1250
    %vm1254 = vcmask 35840
    %v1255 = vsel %vm1254, %v1252, 0.0
    %1256 = vadd.xlane.f32.xlu0 %v1255
    %v1257 = vpop.xlane.xlu0 %1256
    %v1259 = vperm.slane %v1151, 0
    %v1260 = vlaneseq
    %v1261 = vshrl.u32 %v1260, 7
    %1263 = vset.pattern.permute.xlu0 %v1261
    %1264 = vperm.xlu0 %1263, %v1259
    %v1265 = vpop.permute.xlu0 %1264
    %v1267 = vadd.f32 %v1257, %v1265
    %v1268 = vmax.f32 %v1267, 0.0
    %1270 = vset.pattern.permute.xlu0 0
    %1271 = vperm.xlu0 %1270, %v1268
    %v1272 = vpop.permute.xlu0 %1271
    %v1273 = vperm.slane %v1272, %v1242
    %vm1275 = vcmask 24576
    %1276 = vst.msk [vmem:[#allocation8] sm:$0x1] %vm1275, %v1273
    %v1277 = vld [vmem:[#allocation2] sm:$0x1f]
    %v1278 = vld [vmem:[#allocation2 + $0x10] sm:$0x1f]
    %v1279 = vld [vmem:[#allocation2 + $0x20] sm:$0x1f]
    %v1280 = vld [vmem:[#allocation2 + $0x30] sm:$0x1f]
    %v1281 = vld [vmem:[#allocation2 + $0x40] sm:$0x1f]
    %v1282 = vld [vmem:[#allocation2 + $0x50] sm:$0x1f]
    %v1283 = vld [vmem:[#allocation2 + $0x60] sm:$0x1f]
    %v1284 = vld [vmem:[#allocation2 + $0x70] sm:$0x1f]
    %1286 = vrot.lane.b32.xlu0 %v1277, 124
    %v1287 = vpop.permute.xlu0 %1286
    %v1289 = vmul.f32 %v1119, %v1287
    %v1290 = vmul.f32 %v1127, %v1287
    %v1291 = vmul.f32 %v1135, %v1287
    %v1292 = vmul.f32 %v1143, %v1287
    %v1293 = vadd.f32 %v1289, 0.0
    %v1294 = vadd.f32 %v1290, 0.0
    %v1295 = vadd.f32 %v1291, 0.0
    %v1296 = vadd.f32 %v1292, 0.0
    %1298 = vrot.lane.b32.xlu0 %v1278, 124
    %v1299 = vpop.permute.xlu0 %1298
    %v1301 = vmul.f32 %v1120, %v1299
    %v1302 = vmul.f32 %v1128, %v1299
    %v1303 = vmul.f32 %v1136, %v1299
    %v1304 = vmul.f32 %v1144, %v1299
    %v1305 = vadd.f32 %v1293, %v1301
    %v1306 = vadd.f32 %v1294, %v1302
    %v1307 = vadd.f32 %v1295, %v1303
    %v1308 = vadd.f32 %v1296, %v1304
    %1310 = vrot.lane.b32.xlu0 %v1279, 124
    %v1311 = vpop.permute.xlu0 %1310
    %v1313 = vmul.f32 %v1121, %v1311
    %v1314 = vmul.f32 %v1129, %v1311
    %v1315 = vmul.f32 %v1137, %v1311
    %v1316 = vmul.f32 %v1145, %v1311
    %v1317 = vadd.f32 %v1305, %v1313
    %v1318 = vadd.f32 %v1306, %v1314
    %v1319 = vadd.f32 %v1307, %v1315
    %v1320 = vadd.f32 %v1308, %v1316
    %1322 = vrot.lane.b32.xlu0 %v1280, 124
    %v1323 = vpop.permute.xlu0 %1322
    %v1325 = vmul.f32 %v1122, %v1323
    %v1326 = vmul.f32 %v1130, %v1323
    %v1327 = vmul.f32 %v1138, %v1323
    %v1328 = vmul.f32 %v1146, %v1323
    %v1329 = vadd.f32 %v1317, %v1325
    %v1330 = vadd.f32 %v1318, %v1326
    %v1331 = vadd.f32 %v1319, %v1327
    %v1332 = vadd.f32 %v1320, %v1328
    %1334 = vrot.lane.b32.xlu0 %v1281, 124
    %v1335 = vpop.permute.xlu0 %1334
    %v1337 = vmul.f32 %v1123, %v1335
    %v1338 = vmul.f32 %v1131, %v1335
    %v1339 = vmul.f32 %v1139, %v1335
    %v1340 = vmul.f32 %v1147, %v1335
    %v1341 = vadd.f32 %v1329, %v1337
    %v1342 = vadd.f32 %v1330, %v1338
    %v1343 = vadd.f32 %v1331, %v1339
    %v1344 = vadd.f32 %v1332, %v1340
    %1346 = vrot.lane.b32.xlu0 %v1282, 124
    %v1347 = vpop.permute.xlu0 %1346
    %v1349 = vmul.f32 %v1124, %v1347
    %v1350 = vmul.f32 %v1132, %v1347
    %v1351 = vmul.f32 %v1140, %v1347
    %v1352 = vmul.f32 %v1148, %v1347
    %v1353 = vadd.f32 %v1341, %v1349
    %v1354 = vadd.f32 %v1342, %v1350
    %v1355 = vadd.f32 %v1343, %v1351
    %v1356 = vadd.f32 %v1344, %v1352
    %1358 = vrot.lane.b32.xlu0 %v1283, 124
    %v1359 = vpop.permute.xlu0 %1358
    %v1361 = vmul.f32 %v1125, %v1359
    %v1362 = vmul.f32 %v1133, %v1359
    %v1363 = vmul.f32 %v1141, %v1359
    %v1364 = vmul.f32 %v1149, %v1359
    %v1365 = vadd.f32 %v1353, %v1361
    %v1366 = vadd.f32 %v1354, %v1362
    %v1367 = vadd.f32 %v1355, %v1363
    %v1368 = vadd.f32 %v1356, %v1364
    %1370 = vrot.lane.b32.xlu0 %v1284, 124
    %v1371 = vpop.permute.xlu0 %1370
    %v1373 = vmul.f32 %v1126, %v1371
    %v1374 = vmul.f32 %v1134, %v1371
    %v1375 = vmul.f32 %v1142, %v1371
    %v1376 = vmul.f32 %v1150, %v1371
    %v1377 = vadd.f32 %v1365, %v1373
    %v1378 = vadd.f32 %v1366, %v1374
    %v1379 = vadd.f32 %v1367, %v1375
    %v1380 = vadd.f32 %v1368, %v1376
    %v1381 = vsel %vm1224, %v1377, 0.0
    %1382 = vadd.xlane.f32.xlu0 %v1381
    %v1383 = vpop.xlane.xlu0 %1382
    %v1384 = vsel %vm1224, %v1378, 0.0
    %1385 = vadd.xlane.f32.xlu0 %v1384
    %v1386 = vpop.xlane.xlu0 %1385
    %v1387 = vsel %vm1224, %v1379, 0.0
    %1388 = vadd.xlane.f32.xlu0 %v1387
    %v1389 = vpop.xlane.xlu0 %1388
    %v1390 = vsel %vm1224, %v1380, 0.0
    %1391 = vadd.xlane.f32.xlu0 %v1390
    %v1392 = vpop.xlane.xlu0 %1391
    %v1397 = vperm.slane %v1383, %v1242
    %v1398 = vperm.slane %v1386, %v1242
    %v1399 = vperm.slane %v1389, %v1242
    %v1400 = vperm.slane %v1392, %v1242
    %v1401 = vsel %vm1247, %v1398, %v1397
    %v1402 = vsel %vm1249, %v1399, %v1401
    %v1403 = vsel %vm1251, %v1400, %v1402
    %v1405 = vsel %vm1254, %v1403, 0.0
    %1406 = vadd.xlane.f32.xlu0 %v1405
    %v1407 = vpop.xlane.xlu0 %1406
    %v1408 = vadd.f32 %v1407, %v1265
    %v1409 = vmax.f32 %v1408, 0.0
    %1411 = vset.pattern.permute.xlu0 0
    %1412 = vperm.xlu0 %1411, %v1409
    %v1413 = vpop.permute.xlu0 %1412
    %v1414 = vperm.slane %v1413, %v1242
    %1416 = vst.msk [vmem:[#allocation8 + $0x1] sm:$0x1] %vm1275, %v1414
    %v1417 = vld [vmem:[#allocation2 + $0x4] sm:$0x1f]
    %v1418 = vld [vmem:[#allocation2 + $0x14] sm:$0x1f]
    %v1419 = vld [vmem:[#allocation2 + $0x24] sm:$0x1f]
    %v1420 = vld [vmem:[#allocation2 + $0x34] sm:$0x1f]
    %v1421 = vld [vmem:[#allocation2 + $0x44] sm:$0x1f]
    %v1422 = vld [vmem:[#allocation2 + $0x54] sm:$0x1f]
    %v1423 = vld [vmem:[#allocation2 + $0x64] sm:$0x1f]
    %v1424 = vld [vmem:[#allocation2 + $0x74] sm:$0x1f]
    %v1425 = vmul.f32 %v1119, %v1417
    %v1426 = vmul.f32 %v1127, %v1417
    %v1427 = vmul.f32 %v1135, %v1417
    %v1428 = vmul.f32 %v1143, %v1417
    %v1429 = vadd.f32 %v1425, 0.0
    %v1430 = vadd.f32 %v1426, 0.0
    %v1431 = vadd.f32 %v1427, 0.0
    %v1432 = vadd.f32 %v1428, 0.0
    %v1433 = vmul.f32 %v1120, %v1418
    %v1434 = vmul.f32 %v1128, %v1418
    %v1435 = vmul.f32 %v1136, %v1418
    %v1436 = vmul.f32 %v1144, %v1418
    %v1437 = vadd.f32 %v1429, %v1433
    %v1438 = vadd.f32 %v1430, %v1434
    %v1439 = vadd.f32 %v1431, %v1435
    %v1440 = vadd.f32 %v1432, %v1436
    %v1441 = vmul.f32 %v1121, %v1419
    %v1442 = vmul.f32 %v1129, %v1419
    %v1443 = vmul.f32 %v1137, %v1419
    %v1444 = vmul.f32 %v1145, %v1419
    %v1445 = vadd.f32 %v1437, %v1441
    %v1446 = vadd.f32 %v1438, %v1442
    %v1447 = vadd.f32 %v1439, %v1443
    %v1448 = vadd.f32 %v1440, %v1444
    %v1449 = vmul.f32 %v1122, %v1420
    %v1450 = vmul.f32 %v1130, %v1420
    %v1451 = vmul.f32 %v1138, %v1420
    %v1452 = vmul.f32 %v1146, %v1420
    %v1453 = vadd.f32 %v1445, %v1449
    %v1454 = vadd.f32 %v1446, %v1450
    %v1455 = vadd.f32 %v1447, %v1451
    %v1456 = vadd.f32 %v1448, %v1452
    %v1457 = vmul.f32 %v1123, %v1421
    %v1458 = vmul.f32 %v1131, %v1421
    %v1459 = vmul.f32 %v1139, %v1421
    %v1460 = vmul.f32 %v1147, %v1421
    %v1461 = vadd.f32 %v1453, %v1457
    %v1462 = vadd.f32 %v1454, %v1458
    %v1463 = vadd.f32 %v1455, %v1459
    %v1464 = vadd.f32 %v1456, %v1460
    %v1465 = vmul.f32 %v1124, %v1422
    %v1466 = vmul.f32 %v1132, %v1422
    %v1467 = vmul.f32 %v1140, %v1422
    %v1468 = vmul.f32 %v1148, %v1422
    %v1469 = vadd.f32 %v1461, %v1465
    %v1470 = vadd.f32 %v1462, %v1466
    %v1471 = vadd.f32 %v1463, %v1467
    %v1472 = vadd.f32 %v1464, %v1468
    %v1473 = vmul.f32 %v1125, %v1423
    %v1474 = vmul.f32 %v1133, %v1423
    %v1475 = vmul.f32 %v1141, %v1423
    %v1476 = vmul.f32 %v1149, %v1423
    %v1477 = vadd.f32 %v1469, %v1473
    %v1478 = vadd.f32 %v1470, %v1474
    %v1479 = vadd.f32 %v1471, %v1475
    %v1480 = vadd.f32 %v1472, %v1476
    %v1481 = vmul.f32 %v1126, %v1424
    %v1482 = vmul.f32 %v1134, %v1424
    %v1483 = vmul.f32 %v1142, %v1424
    %v1484 = vmul.f32 %v1150, %v1424
    %v1485 = vadd.f32 %v1477, %v1481
    %v1486 = vadd.f32 %v1478, %v1482
    %v1487 = vadd.f32 %v1479, %v1483
    %v1488 = vadd.f32 %v1480, %v1484
    %v1489 = vsel %vm1224, %v1485, 0.0
    %1490 = vadd.xlane.f32.xlu0 %v1489
    %v1491 = vpop.xlane.xlu0 %1490
    %v1492 = vsel %vm1224, %v1486, 0.0
    %1493 = vadd.xlane.f32.xlu0 %v1492
    %v1494 = vpop.xlane.xlu0 %1493
    %v1495 = vsel %vm1224, %v1487, 0.0
    %1496 = vadd.xlane.f32.xlu0 %v1495
    %v1497 = vpop.xlane.xlu0 %1496
    %v1498 = vsel %vm1224, %v1488, 0.0
    %1499 = vadd.xlane.f32.xlu0 %v1498
    %v1500 = vpop.xlane.xlu0 %1499
    %v1505 = vperm.slane %v1491, %v1242
    %v1506 = vperm.slane %v1494, %v1242
    %v1507 = vperm.slane %v1497, %v1242
    %v1508 = vperm.slane %v1500, %v1242
    %v1509 = vsel %vm1247, %v1506, %v1505
    %v1510 = vsel %vm1249, %v1507, %v1509
    %v1511 = vsel %vm1251, %v1508, %v1510
    %v1513 = vsel %vm1254, %v1511, 0.0
    %1514 = vadd.xlane.f32.xlu0 %v1513
    %v1515 = vpop.xlane.xlu0 %1514
    %v1516 = vadd.f32 %v1515, %v1265
    %v1517 = vmax.f32 %v1516, 0.0
    %1519 = vset.pattern.permute.xlu0 0
    %1520 = vperm.xlu0 %1519, %v1517
    %v1521 = vpop.permute.xlu0 %1520
    %v1522 = vperm.slane %v1521, %v1242
    %1524 = vst.msk [vmem:[#allocation8 + $0x2] sm:$0x1] %vm1275, %v1522
    %v1525 = vld [vmem:[#allocation2 + $0x4] sm:$0x1f]
    %v1526 = vld [vmem:[#allocation2 + $0x14] sm:$0x1f]
    %v1527 = vld [vmem:[#allocation2 + $0x24] sm:$0x1f]
    %v1528 = vld [vmem:[#allocation2 + $0x34] sm:$0x1f]
    %v1529 = vld [vmem:[#allocation2 + $0x44] sm:$0x1f]
    %v1530 = vld [vmem:[#allocation2 + $0x54] sm:$0x1f]
    %v1531 = vld [vmem:[#allocation2 + $0x64] sm:$0x1f]
    %v1532 = vld [vmem:[#allocation2 + $0x74] sm:$0x1f]
    %1534 = vrot.lane.b32.xlu0 %v1525, 124
    %v1535 = vpop.permute.xlu0 %1534
    %v1537 = vmul.f32 %v1119, %v1535
    %v1538 = vmul.f32 %v1127, %v1535
    %v1539 = vmul.f32 %v1135, %v1535
    %v1540 = vmul.f32 %v1143, %v1535
    %v1541 = vadd.f32 %v1537, 0.0
    %v1542 = vadd.f32 %v1538, 0.0
    %v1543 = vadd.f32 %v1539, 0.0
    %v1544 = vadd.f32 %v1540, 0.0
    %1546 = vrot.lane.b32.xlu0 %v1526, 124
    %v1547 = vpop.permute.xlu0 %1546
    %v1549 = vmul.f32 %v1120, %v1547
    %v1550 = vmul.f32 %v1128, %v1547
    %v1551 = vmul.f32 %v1136, %v1547
    %v1552 = vmul.f32 %v1144, %v1547
    %v1553 = vadd.f32 %v1541, %v1549
    %v1554 = vadd.f32 %v1542, %v1550
    %v1555 = vadd.f32 %v1543, %v1551
    %v1556 = vadd.f32 %v1544, %v1552
    %1558 = vrot.lane.b32.xlu0 %v1527, 124
    %v1559 = vpop.permute.xlu0 %1558
    %v1561 = vmul.f32 %v1121, %v1559
    %v1562 = vmul.f32 %v1129, %v1559
    %v1563 = vmul.f32 %v1137, %v1559
    %v1564 = vmul.f32 %v1145, %v1559
    %v1565 = vadd.f32 %v1553, %v1561
    %v1566 = vadd.f32 %v1554, %v1562
    %v1567 = vadd.f32 %v1555, %v1563
    %v1568 = vadd.f32 %v1556, %v1564
    %1570 = vrot.lane.b32.xlu0 %v1528, 124
    %v1571 = vpop.permute.xlu0 %1570
    %v1573 = vmul.f32 %v1122, %v1571
    %v1574 = vmul.f32 %v1130, %v1571
    %v1575 = vmul.f32 %v1138, %v1571
    %v1576 = vmul.f32 %v1146, %v1571
    %v1577 = vadd.f32 %v1565, %v1573
    %v1578 = vadd.f32 %v1566, %v1574
    %v1579 = vadd.f32 %v1567, %v1575
    %v1580 = vadd.f32 %v1568, %v1576
    %1582 = vrot.lane.b32.xlu0 %v1529, 124
    %v1583 = vpop.permute.xlu0 %1582
    %v1585 = vmul.f32 %v1123, %v1583
    %v1586 = vmul.f32 %v1131, %v1583
    %v1587 = vmul.f32 %v1139, %v1583
    %v1588 = vmul.f32 %v1147, %v1583
    %v1589 = vadd.f32 %v1577, %v1585
    %v1590 = vadd.f32 %v1578, %v1586
    %v1591 = vadd.f32 %v1579, %v1587
    %v1592 = vadd.f32 %v1580, %v1588
    %1594 = vrot.lane.b32.xlu0 %v1530, 124
    %v1595 = vpop.permute.xlu0 %1594
    %v1597 = vmul.f32 %v1124, %v1595
    %v1598 = vmul.f32 %v1132, %v1595
    %v1599 = vmul.f32 %v1140, %v1595
    %v1600 = vmul.f32 %v1148, %v1595
    %v1601 = vadd.f32 %v1589, %v1597
    %v1602 = vadd.f32 %v1590, %v1598
    %v1603 = vadd.f32 %v1591, %v1599
    %v1604 = vadd.f32 %v1592, %v1600
    %1606 = vrot.lane.b32.xlu0 %v1531, 124
    %v1607 = vpop.permute.xlu0 %1606
    %v1609 = vmul.f32 %v1125, %v1607
    %v1610 = vmul.f32 %v1133, %v1607
    %v1611 = vmul.f32 %v1141, %v1607
    %v1612 = vmul.f32 %v1149, %v1607
    %v1613 = vadd.f32 %v1601, %v1609
    %v1614 = vadd.f32 %v1602, %v1610
    %v1615 = vadd.f32 %v1603, %v1611
    %v1616 = vadd.f32 %v1604, %v1612
    %1618 = vrot.lane.b32.xlu0 %v1532, 124
    %v1619 = vpop.permute.xlu0 %1618
    %v1621 = vmul.f32 %v1126, %v1619
    %v1622 = vmul.f32 %v1134, %v1619
    %v1623 = vmul.f32 %v1142, %v1619
    %v1624 = vmul.f32 %v1150, %v1619
    %v1625 = vadd.f32 %v1613, %v1621
    %v1626 = vadd.f32 %v1614, %v1622
    %v1627 = vadd.f32 %v1615, %v1623
    %v1628 = vadd.f32 %v1616, %v1624
    %v1629 = vsel %vm1224, %v1625, 0.0
    %1630 = vadd.xlane.f32.xlu0 %v1629
    %v1631 = vpop.xlane.xlu0 %1630
    %v1632 = vsel %vm1224, %v1626, 0.0
    %1633 = vadd.xlane.f32.xlu0 %v1632
    %v1634 = vpop.xlane.xlu0 %1633
    %v1635 = vsel %vm1224, %v1627, 0.0
    %1636 = vadd.xlane.f32.xlu0 %v1635
    %v1637 = vpop.xlane.xlu0 %1636
    %v1638 = vsel %vm1224, %v1628, 0.0
    %1639 = vadd.xlane.f32.xlu0 %v1638
    %v1640 = vpop.xlane.xlu0 %1639
    %v1645 = vperm.slane %v1631, %v1242
    %v1646 = vperm.slane %v1634, %v1242
    %v1647 = vperm.slane %v1637, %v1242
    %v1648 = vperm.slane %v1640, %v1242
    %v1649 = vsel %vm1247, %v1646, %v1645
    %v1650 = vsel %vm1249, %v1647, %v1649
    %v1651 = vsel %vm1251, %v1648, %v1650
    %v1653 = vsel %vm1254, %v1651, 0.0
    %1654 = vadd.xlane.f32.xlu0 %v1653
    %v1655 = vpop.xlane.xlu0 %1654
    %v1656 = vadd.f32 %v1655, %v1265
    %v1657 = vmax.f32 %v1656, 0.0
    %1659 = vset.pattern.permute.xlu0 0
    %1660 = vperm.xlu0 %1659, %v1657
    %v1661 = vpop.permute.xlu0 %1660
    %v1662 = vperm.slane %v1661, %v1242
    %1664 = vst.msk [vmem:[#allocation8 + $0x3] sm:$0x1] %vm1275, %v1662
    // Predicated region
    $region30: #{_model_forward.1} parent=1 // pred_check
      _
    $region31: #{_model_forward.1} parent=1 // pred_check_branch
      %1666 = sbr.rel (0) target = $region33
    $region32: #{_model_forward.1} parent=1 // pred_region
      %1668 = vsyncadd [#allocation4], 0
      %s1670 = sshll.u32 [#allocation8], 4
      %s1671 = int_to_ptr.vmem [resolvable:$true] %s1670
      %s1672 = sshll.u32 %s5, 4
      %s1673 = int_to_ptr.hbm [resolvable:$true] %s1672
      %1675 = dma.vmem_to_hbm [thread:$0]  %s1671, 64, %s1673, [#allocation4]
    $region33: #{_model_forward.1} parent=1 // pred_fallthru
      _
    // Predicated region
    $region34: #{_model_forward.1} parent=1 // pred_check
      _
    $region35: #{_model_forward.1} parent=1 // pred_check_branch
      %1677 = sbr.rel (0) target = $region37
    $region36: #{_model_forward.1} parent=1 // pred_region
      %1679 = dma.done [#allocation4], 64
    $region37: #{_model_forward.1} parent=1 // pred_fallthru
      _
    %1680 = vsyncpa [#allocation4], 1
    %1681 = vsyncpa [#allocation5], 1
    %1682 = vsyncpa [#allocation7], 1

</llo_original>
